<compile_context>
chip_gen: v6e
topology: v6e:2x2x1
jax: 0.10.0
libtpu: 0.0.40
codegen_flags: <defaults>
</compile_context>

<pallas_src>
import functools
import math

import jax
import jax.numpy as jnp
from jax import lax
from jax.experimental import pallas as pl
from jax.experimental.pallas import tpu as pltpu


def _round_up(x, m):
    return (x + m - 1) // m * m


def _vmem_capacity_bytes():
    try:
        return int(pltpu.get_tpu_info().vmem_capacity_bytes)
    except Exception:
        return 64 * 1024 * 1024          # conservative default: v7x per-core VMEM


def _choose_edge_tile(e, n_pad, d_pad, head, isz):
    """Generation-aware edge-tile size and VMEM limit."""
    cap = _vmem_capacity_bytes()
    # Leave headroom for Mosaic-internal scratch: v5e/v6e (128 MiB) -> ~100 MiB,
    # v7x (64 MiB) -> ~48 MiB.
    vmem_limit = int(max(32 * 1024 * 1024,
                         min(cap - 16 * 1024 * 1024, 100 * 1024 * 1024)))
    # Node-resident bytes (x2: conservatively assume Pallas double-buffers even
    # constant-index-map blocks).
    # TODO(synk): request single buffering for the constant-index residents via
    # pipeline_mode=pl.Buffered(1) once verified on all target jax versions.
    resident = 2 * (3 * n_pad * d_pad * isz                 # Qn / Kn / Vn
                    + n_pad * (d_pad + head) * 4            # partial accumulators
                    + (2 * d_pad * head + 2 * d_pad) * 4)   # head masks, gamma, beta
    tile_budget = vmem_limit - resident - 4 * 1024 * 1024
    if tile_budget < (1 << 20):
        # TODO(synk): add a node-tiling grid axis (mask the one-hot to a node
        # block and re-stream edges per node tile) so very large N still fits
        # v7x's 64 MiB VMEM.
        raise ValueError(
            f"node-resident arrays ({resident} B) leave no room for an edge "
            f"tile within the {vmem_limit} B VMEM budget; node tiling needed")
    # Per-edge live temporaries: 3 one-hots (compute dtype) + ~6 (TE, D_pad) f32.
    bytes_per_edge = 3 * n_pad * isz + 6 * d_pad * 4 + 64
    te = tile_budget // bytes_per_edge
    te = max(128, min(8192, te))
    te = (te // 128) * 128                # lane-dense edge blocks need te % 128 == 0
    te = min(te, _round_up(max(e, 1), 128))
    return te, vmem_limit


def _gt_edge_kernel(rows_sub_ref, cols_sub_ref, rows_lane_ref,
                    qn_ref, kn_ref, vn_ref, head_mask_ref, head_mask_t_ref,
                    att_sum_ref, agg_ref):
    """Streams one edge tile per inner grid step.

    Outputs att_sum_ref (N_pad, H) / agg_ref (N_pad, D_pad) are the per-core
    partial f32 accumulators; their block index only depends on the outer
    "parallel" core-split axis, so they stay VMEM-resident across the inner
    "arbitrary" edge axis.
    """
    step = pl.program_id(1)
    cdt = qn_ref.dtype
    n_pad = qn_ref.shape[0]

    @pl.when(step == 0)
    def _init():
        att_sum_ref[...] = jnp.zeros_like(att_sum_ref)
        agg_ref[...] = jnp.zeros_like(agg_ref)

    rows_s = rows_sub_ref[...]                     # (TE, 1) int32, sublane layout
    cols_s = cols_sub_ref[...]                     # (TE, 1) int32
    rows_l = rows_lane_ref[...]                    # (1, TE) int32, lane-dense
    te = rows_s.shape[0]

    # In-register incidence one-hots, built in BOTH orientations so every
    # matmul below is MXU-native (no transposed dot_general / no vxpose of a
    # one-hot tile).  Padded edges carry the out-of-range index n_pad, so their
    # one-hot rows/columns are all zero -> they are fully inert.
    iota_en = lax.broadcasted_iota(jnp.int32, (te, n_pad), 1)
    iota_ne = lax.broadcasted_iota(jnp.int32, (n_pad, te), 0)
    row_oh_en = (rows_s == iota_en).astype(cdt)    # (TE, N_pad): gather q
    col_oh_en = (cols_s == iota_en).astype(cdt)    # (TE, N_pad): gather k, v
    row_oh_ne = (rows_l == iota_ne).astype(cdt)    # (N_pad, TE): scatter-add

    # Gather PRE-PROJECTED node features (projections hoisted to the node side).
    # TODO(synk): for very large N (N_pad >> D_pad) switch to a scalar-prefetch
    # / DMA row gather so the gather cost is O(E*D) bytes instead of O(E*N*D)
    # MXU FLOPs; keep the one-hot only for the scatter-add.
    q = jnp.dot(row_oh_en, qn_ref[...], preferred_element_type=jnp.float32)
    k = jnp.dot(col_oh_en, kn_ref[...], preferred_element_type=jnp.float32)
    v = jnp.dot(col_oh_en, vn_ref[...], preferred_element_type=jnp.float32)

    # Per-head q.k via the dim->head indicator, then clip and exponentiate.
    att = jnp.dot(q * k, head_mask_ref[...], preferred_element_type=jnp.float32)
    att = jnp.clip(att, -10.0, 10.0)
    exp_att = jnp.exp(att)                                          # (TE, H) f32

    # Broadcast each head's weight back onto that head's D lanes.
    exp_bcast = jnp.dot(exp_att, head_mask_t_ref[...],
                        preferred_element_type=jnp.float32)         # (TE, D_pad)
    weighted = exp_bcast * v                                        # (TE, D_pad)

    # Scatter-add to destination (row) nodes with the (N_pad, TE) one-hot.
    att_sum_ref[...] += jnp.dot(row_oh_ne, exp_att.astype(cdt),
                                preferred_element_type=jnp.float32)
    agg_ref[...] += jnp.dot(row_oh_ne, weighted.astype(cdt),
                            preferred_element_type=jnp.float32)


def _gt_finalize_kernel(att_sum_ref, agg_ref, embeds_ref, head_mask_t_ref,
                        gamma_ref, beta_ref, out_ref, *, d_true):
    """Merge per-core partials, normalize, residual, LayerNorm (one node tile)."""
    att_sum = jnp.sum(att_sum_ref[...], axis=0)                     # (TN, H)
    agg = jnp.sum(agg_ref[...], axis=0)                             # (TN, D_pad)
    # Per-node softmax denominator, broadcast onto each head's D lanes.
    denom = jnp.dot(att_sum, head_mask_t_ref[...],
                    preferred_element_type=jnp.float32)             # (TN, D_pad)
    # Padded lanes / zero-in-degree nodes: denom == 0 and agg == 0 exactly, so
    # the quotient is exactly 0 and out reduces to the residual (matches ref).
    out = agg / (denom + 1e-8) + embeds_ref[...]                    # residual, f32
    # LayerNorm over the TRUE feature dim: padded lanes of `out` are exactly
    # zero, so full-lane sums divided by d_true are exact.
    inv_d = 1.0 / d_true
    mean = jnp.sum(out, axis=-1, keepdims=True) * inv_d
    ex2 = jnp.sum(out * out, axis=-1, keepdims=True) * inv_d
    var = ex2 - mean * mean
    normed = (out - mean) * lax.rsqrt(var + 1e-6)
    out_ref[...] = (normed * gamma_ref[...] + beta_ref[...]).astype(out_ref.dtype)


@functools.partial(jax.jit, static_argnames=("head", "compute_dtype"))
def gt_layer_forward(edge_index, embeds, wq, wk, wv, gamma, beta, *,
                     head, compute_dtype=jnp.bfloat16):
    rows, cols = edge_index[0], edge_index[1]
    n, d = embeds.shape
    e = rows.shape[0]
    assert d % head == 0
    dh = d // head
    out_dtype = embeds.dtype
    cdt = compute_dtype
    isz = jnp.dtype(cdt).itemsize

    # NOTE: if d is genuinely small (e.g. 32), most MXU columns multiply zeros;
    # batching several independent graphs along the lane axis would recover them.
    d_pad = _round_up(d, 128)                       # lane-dense feature axis
    node_blk = min(512, _round_up(n, 8))            # finalize-kernel node tile
    n_pad = _round_up(n, node_blk)

    n_splits = 2                                    # one edge range per TensorCore
    te, vmem_limit = _choose_edge_tile(e, n_pad, d_pad, head, isz)
    e_pad = _round_up(max(e, 1), te * n_splits)
    tiles_per_split = e_pad // (te * n_splits)

    # ---- O(E) / O(N*D) XLA-side prep; no dense (E, N) incidence in HBM ----
    rows_i = rows.astype(jnp.int32)
    cols_i = cols.astype(jnp.int32)
    rows_sub = jnp.full((e_pad, 1), n_pad, jnp.int32).at[:e, 0].set(rows_i)
    cols_sub = jnp.full((e_pad, 1), n_pad, jnp.int32).at[:e, 0].set(cols_i)
    rows_lane = jnp.full((1, e_pad), n_pad, jnp.int32).at[0, :e].set(rows_i)

    emb32 = embeds.astype(jnp.float32)
    qn = emb32 @ wq.astype(jnp.float32)             # hoisted node-side projections
    kn = emb32 @ wk.astype(jnp.float32)
    vn = emb32 @ wv.astype(jnp.float32)
    qn_p = jnp.zeros((n_pad, d_pad), cdt).at[:n, :d].set(qn.astype(cdt))
    kn_p = jnp.zeros((n_pad, d_pad), cdt).at[:n, :d].set(kn.astype(cdt))
    vn_p = jnp.zeros((n_pad, d_pad), cdt).at[:n, :d].set(vn.astype(cdt))
    emb_p = jnp.zeros((n_pad, d_pad), jnp.float32).at[:n, :d].set(emb32)

    dim_head = jnp.arange(d_pad, dtype=jnp.int32) // dh
    head_ids = jnp.arange(head, dtype=jnp.int32)
    head_mask = (dim_head[:, None] == head_ids[None, :]).astype(jnp.float32)    # (D_pad, H)
    head_mask_t = (head_ids[:, None] == dim_head[None, :]).astype(jnp.float32)  # (H, D_pad)
    gamma_p = jnp.zeros((1, d_pad), jnp.float32).at[0, :d].set(gamma.astype(jnp.float32))
    beta_p = jnp.zeros((1, d_pad), jnp.float32).at[0, :d].set(beta.astype(jnp.float32))

    resident = lambda c, i: (0, 0)                  # VMEM-resident across edge tiles
    edge_sub_blk = lambda c, i: (c * tiles_per_split + i, 0)
    edge_lane_blk = lambda c, i: (0, c * tiles_per_split + i)

    flops = int(3 * 2 * e_pad * n_pad * d_pad          # q/k/v one-hot gathers
                + 2 * 2 * e_pad * d_pad * head         # head reduce + broadcast
                + 2 * e_pad * n_pad * (d_pad + head)   # scatter-adds
                + 6 * e_pad * d_pad)                   # elementwise
    transcendentals = int(e_pad * head)
    bytes_accessed = int(3 * e_pad * 4
                         + 3 * n_pad * d_pad * isz
                         + n_splits * n_pad * (d_pad + head) * 4
                         + 4 * d_pad * (2 * head + 2))

    att_sum_part, agg_part = pl.pallas_call(
        _gt_edge_kernel,
        out_shape=(jax.ShapeDtypeStruct((n_splits, n_pad, head), jnp.float32),
                   jax.ShapeDtypeStruct((n_splits, n_pad, d_pad), jnp.float32)),
        grid_spec=pltpu.PrefetchScalarGridSpec(
            num_scalar_prefetch=0,
            grid=(n_splits, tiles_per_split),
            in_specs=[
                pl.BlockSpec((te, 1), edge_sub_blk),        # rows (sublane layout)
                pl.BlockSpec((te, 1), edge_sub_blk),        # cols (sublane layout)
                pl.BlockSpec((1, te), edge_lane_blk),       # rows (lane-dense)
                pl.BlockSpec((n_pad, d_pad), resident),     # Qn
                pl.BlockSpec((n_pad, d_pad), resident),     # Kn
                pl.BlockSpec((n_pad, d_pad), resident),     # Vn
                pl.BlockSpec((d_pad, head), resident),      # dim -> head mask
                pl.BlockSpec((head, d_pad), resident),      # head -> dim mask
            ],
            out_specs=[
                pl.BlockSpec((None, n_pad, head), lambda c, i: (c, 0, 0)),
                pl.BlockSpec((None, n_pad, d_pad), lambda c, i: (c, 0, 0)),
            ]),
        compiler_params=pltpu.CompilerParams(
            dimension_semantics=("parallel", "arbitrary"),
            vmem_limit_bytes=vmem_limit),
        cost_estimate=pl.CostEstimate(flops=flops,
                                      transcendentals=transcendentals,
                                      bytes_accessed=bytes_accessed),
    )(rows_sub, cols_sub, rows_lane, qn_p, kn_p, vn_p, head_mask, head_mask_t)

    # ---- tiny O(N*D) merge / normalize / residual / LayerNorm epilogue ----
    out_p = pl.pallas_call(
        functools.partial(_gt_finalize_kernel, d_true=d),
        out_shape=jax.ShapeDtypeStruct((n_pad, d_pad), out_dtype),
        grid_spec=pltpu.PrefetchScalarGridSpec(
            num_scalar_prefetch=0,
            grid=(n_pad // node_blk,),
            in_specs=[
                pl.BlockSpec((n_splits, node_blk, head), lambda i: (0, i, 0)),
                pl.BlockSpec((n_splits, node_blk, d_pad), lambda i: (0, i, 0)),
                pl.BlockSpec((node_blk, d_pad), lambda i: (i, 0)),
                pl.BlockSpec((head, d_pad), lambda i: (0, 0)),
                pl.BlockSpec((1, d_pad), lambda i: (0, 0)),
                pl.BlockSpec((1, d_pad), lambda i: (0, 0)),
            ],
            out_specs=pl.BlockSpec((node_blk, d_pad), lambda i: (i, 0))),
        compiler_params=pltpu.CompilerParams(dimension_semantics=("parallel",)),
    )(att_sum_part, agg_part, emb_p, head_mask_t, gamma_p, beta_p)

    return out_p[:n, :d]


def gt_layer_reference(edge_index, embeds, wq, wk, wv, gamma, beta, *, head):
    """Pure-JAX f32 reference mirroring the PyTorch forward, for validation."""
    rows, cols = edge_index[0], edge_index[1]
    n, d = embeds.shape
    dh = d // head
    row_emb = embeds[rows]
    col_emb = embeds[cols]
    e = row_emb.shape[0]
    q = (row_emb @ wq).reshape(e, head, dh)
    k = (col_emb @ wk).reshape(e, head, dh)
    v = (col_emb @ wv).reshape(e, head, dh)
    att = jnp.einsum("ehd,ehd->eh", q, k)
    att = jnp.clip(att, -10.0, 10.0)
    exp_att = jnp.exp(att)
    att_norm = jax.ops.segment_sum(exp_att, rows, num_segments=n)[rows]
    att = exp_att / (att_norm + 1e-8)
    res = (att[:, :, None] * v).reshape(e, d)
    agg = jax.ops.segment_sum(res, rows, num_segments=n)
    out = agg + embeds
    mean = out.mean(-1, keepdims=True)
    var = ((out - mean) ** 2).mean(-1, keepdims=True)
    return (out - mean) / jnp.sqrt(var + 1e-6) * gamma + beta


def xavier_uniform(key, fan_in, fan_out, dtype=jnp.float32):
    limit = math.sqrt(6.0 / (fan_in + fan_out))
    return jax.random.uniform(key, (fan_in, fan_out), dtype=dtype,
                              minval=-limit, maxval=limit)


if __name__ == "__main__":
    # Small synthetic problem: att_d_model=32, head=4, 16 nodes, 32 edges.
    ATT_D_MODEL = 32
    HEAD = 4
    N_NODES = 16
    N_EDGES = 32

    key = jax.random.PRNGKey(0)
    k_emb, k_rows, k_cols, k_q, k_k, k_v = jax.random.split(key, 6)

    embeds = jax.random.normal(k_emb, (N_NODES, ATT_D_MODEL), dtype=jnp.float32)
    rows = jax.random.randint(k_rows, (N_EDGES,), 0, N_NODES, dtype=jnp.int32)
    cols = jax.random.randint(k_cols, (N_EDGES,), 0, N_NODES, dtype=jnp.int32)
    edge_index = jnp.stack([rows, cols], axis=0)           # (2, E)

    wq = xavier_uniform(k_q, ATT_D_MODEL, ATT_D_MODEL)
    wk = xavier_uniform(k_k, ATT_D_MODEL, ATT_D_MODEL)
    wv = xavier_uniform(k_v, ATT_D_MODEL, ATT_D_MODEL)
    gamma = jnp.ones((ATT_D_MODEL,), dtype=jnp.float32)    # LayerNorm weight
    beta = jnp.zeros((ATT_D_MODEL,), dtype=jnp.float32)    # LayerNorm bias

    ref = gt_layer_reference(edge_index, embeds, wq, wk, wv, gamma, beta, head=HEAD)

    # Strict check: f32 compute path (exact one-hot gathers/scatters).
    out_f32 = jax.block_until_ready(
        gt_layer_forward(edge_index, embeds, wq, wk, wv, gamma, beta,
                         head=HEAD, compute_dtype=jnp.float32))
    assert out_f32.shape == (N_NODES, ATT_D_MODEL)
    assert jnp.allclose(out_f32, ref, rtol=2e-3, atol=2e-3), "f32 kernel mismatch"

    # Fast path: bf16 MXU operands with f32 accumulation (looser tolerance
    # accounts for bf16 rounding of Qn/Kn/Vn and expAtt).
    out_bf16 = jax.block_until_ready(
        gt_layer_forward(edge_index, embeds, wq, wk, wv, gamma, beta,
                         head=HEAD, compute_dtype=jnp.bfloat16))
    assert out_bf16.shape == (N_NODES, ATT_D_MODEL)
    assert jnp.allclose(out_bf16, ref, rtol=1e-1, atol=1.5e-1), "bf16 kernel mismatch"

    print("KERNEL_OK")
</pallas_src>

<mosaic_0001>
module attributes {stable_mosaic.version = 11 : i64} {
  func.func @_gt_edge_kernel(%arg0: i32, %arg1: i32, %arg2: memref<128x1xi32, #tpu.memory_space<vmem>>, %arg3: memref<128x1xi32, #tpu.memory_space<vmem>>, %arg4: memref<1x128xi32, #tpu.memory_space<vmem>>, %arg5: memref<16x128xf32, #tpu.memory_space<vmem>>, %arg6: memref<16x128xf32, #tpu.memory_space<vmem>>, %arg7: memref<16x128xf32, #tpu.memory_space<vmem>>, %arg8: memref<128x4xf32, #tpu.memory_space<vmem>>, %arg9: memref<4x128xf32, #tpu.memory_space<vmem>>, %arg10: memref<1x16x4xf32, #tpu.memory_space<vmem>>, %arg11: memref<1x16x128xf32, #tpu.memory_space<vmem>>) attributes {dimension_semantics = [#tpu.dimension_semantics<parallel>, #tpu.dimension_semantics<arbitrary>], iteration_bounds = array<i64: 2, 1>, scalar_prefetch = 0 : i64, scratch_operands = 0 : i64, tpu.core_type = #tpu.core_type<tc>, window_params = [{transform_indices = @transform_0, window_bounds = array<i64: 128, 1>}, {transform_indices = @transform_1, window_bounds = array<i64: 128, 1>}, {transform_indices = @transform_2, window_bounds = array<i64: 1, 128>}, {pipeline_mode = #tpu.pipeline_mode<synchronous>, transform_indices = @transform_3, window_bounds = array<i64: 16, 128>}, {pipeline_mode = #tpu.pipeline_mode<synchronous>, transform_indices = @transform_4, window_bounds = array<i64: 16, 128>}, {pipeline_mode = #tpu.pipeline_mode<synchronous>, transform_indices = @transform_5, window_bounds = array<i64: 16, 128>}, {pipeline_mode = #tpu.pipeline_mode<synchronous>, transform_indices = @transform_6, window_bounds = array<i64: 128, 4>}, {pipeline_mode = #tpu.pipeline_mode<synchronous>, transform_indices = @transform_7, window_bounds = array<i64: 4, 128>}, {transform_indices = @transform_8, window_bounds = array<i64: 1, 16, 4>}, {transform_indices = @transform_9, window_bounds = array<i64: 1, 16, 128>}]} {
    %c0_i32 = arith.constant 0 : i32
    %0 = arith.cmpi eq, %arg1, %c0_i32 : i32
    %1 = arith.extui %0 : i1 to i32
    %c0_i32_0 = arith.constant 0 : i32
    %2 = arith.cmpi ne, %1, %c0_i32_0 : i32
    scf.if %2 {
      %cst_36 = arith.constant 0.000000e+00 : f32
      %51 = vector.broadcast %cst_36 : f32 to vector<16x4xf32>
      %c0_37 = arith.constant 0 : index
      %c0_38 = arith.constant 0 : index
      %c0_39 = arith.constant 0 : index
      %52 = vector.load %arg10[%c0_37, %c0_38, %c0_39] : memref<1x16x4xf32, #tpu.memory_space<vmem>>, vector<1x16x4xf32>
      %53 = vector.shape_cast %52 : vector<1x16x4xf32> to vector<16x4xf32>
      %54 = vector.shape_cast %51 : vector<16x4xf32> to vector<1x16x4xf32>
      tpu.vector_store %arg10[%c0_37, %c0_38, %c0_39], %54 {strides = array<i32>} : memref<1x16x4xf32, #tpu.memory_space<vmem>>, vector<1x16x4xf32>,
      %cst_40 = arith.constant 0.000000e+00 : f32
      %55 = vector.broadcast %cst_40 : f32 to vector<16x128xf32>
      %c0_41 = arith.constant 0 : index
      %c0_42 = arith.constant 0 : index
      %c0_43 = arith.constant 0 : index
      %56 = vector.load %arg11[%c0_41, %c0_42, %c0_43] : memref<1x16x128xf32, #tpu.memory_space<vmem>>, vector<1x16x128xf32>
      %57 = vector.shape_cast %56 : vector<1x16x128xf32> to vector<16x128xf32>
      %58 = vector.shape_cast %55 : vector<16x128xf32> to vector<1x16x128xf32>
      tpu.vector_store %arg11[%c0_41, %c0_42, %c0_43], %58 {strides = array<i32>} : memref<1x16x128xf32, #tpu.memory_space<vmem>>, vector<1x16x128xf32>,
    } else {
    }
    %c0 = arith.constant 0 : index
    %c0_1 = arith.constant 0 : index
    %3 = vector.load %arg2[%c0, %c0_1] : memref<128x1xi32, #tpu.memory_space<vmem>>, vector<128x1xi32>
    %c0_2 = arith.constant 0 : index
    %c0_3 = arith.constant 0 : index
    %4 = vector.load %arg3[%c0_2, %c0_3] : memref<128x1xi32, #tpu.memory_space<vmem>>, vector<128x1xi32>
    %c0_4 = arith.constant 0 : index
    %c0_5 = arith.constant 0 : index
    %5 = vector.load %arg4[%c0_4, %c0_5] : memref<1x128xi32, #tpu.memory_space<vmem>>, vector<1x128xi32>
    %6 = tpu.iota {dimensions = array<i32: 1>} : vector<128x16xi32>
    %7 = tpu.iota {dimensions = array<i32: 0>} : vector<16x128xi32>
    %8 = vector.broadcast %3 : vector<128x1xi32> to vector<128x16xi32>
    %9 = arith.cmpi eq, %8, %6 : vector<128x16xi32>
    %10 = arith.extui %9 : vector<128x16xi1> to vector<128x16xi32>
    %11 = arith.sitofp %10 : vector<128x16xi32> to vector<128x16xf32>
    %12 = vector.broadcast %4 : vector<128x1xi32> to vector<128x16xi32>
    %13 = arith.cmpi eq, %12, %6 : vector<128x16xi32>
    %14 = arith.extui %13 : vector<128x16xi1> to vector<128x16xi32>
    %15 = arith.sitofp %14 : vector<128x16xi32> to vector<128x16xf32>
    %16 = vector.broadcast %5 : vector<1x128xi32> to vector<16x128xi32>
    %17 = arith.cmpi eq, %16, %7 : vector<16x128xi32>
    %18 = arith.extui %17 : vector<16x128xi1> to vector<16x128xi32>
    %19 = arith.sitofp %18 : vector<16x128xi32> to vector<16x128xf32>
    %c0_6 = arith.constant 0 : index
    %c0_7 = arith.constant 0 : index
    %20 = vector.load %arg5[%c0_6, %c0_7] : memref<16x128xf32, #tpu.memory_space<vmem>>, vector<16x128xf32>
    %cst = arith.constant dense<0.000000e+00> : vector<128x128xf32>
    %21 = tpu.matmul %11, %20, %cst {dimension_numbers = #tpu.dot_dimension_numbers<[1], [0], [0], [1], [0, 0, 1, 1], [], []>} : vector<128x16xf32>, vector<16x128xf32>, vector<128x128xf32> -> vector<128x128xf32>
    %c0_8 = arith.constant 0 : index
    %c0_9 = arith.constant 0 : index
    %22 = vector.load %arg6[%c0_8, %c0_9] : memref<16x128xf32, #tpu.memory_space<vmem>>, vector<16x128xf32>
    %cst_10 = arith.constant dense<0.000000e+00> : vector<128x128xf32>
    %23 = tpu.matmul %15, %22, %cst_10 {dimension_numbers = #tpu.dot_dimension_numbers<[1], [0], [0], [1], [0, 0, 1, 1], [], []>} : vector<128x16xf32>, vector<16x128xf32>, vector<128x128xf32> -> vector<128x128xf32>
    %c0_11 = arith.constant 0 : index
    %c0_12 = arith.constant 0 : index
    %24 = vector.load %arg7[%c0_11, %c0_12] : memref<16x128xf32, #tpu.memory_space<vmem>>, vector<16x128xf32>
    %cst_13 = arith.constant dense<0.000000e+00> : vector<128x128xf32>
    %25 = tpu.matmul %15, %24, %cst_13 {dimension_numbers = #tpu.dot_dimension_numbers<[1], [0], [0], [1], [0, 0, 1, 1], [], []>} : vector<128x16xf32>, vector<16x128xf32>, vector<128x128xf32> -> vector<128x128xf32>
    %26 = arith.mulf %21, %23 : vector<128x128xf32>
    %c0_14 = arith.constant 0 : index
    %c0_15 = arith.constant 0 : index
    %27 = vector.load %arg8[%c0_14, %c0_15] : memref<128x4xf32, #tpu.memory_space<vmem>>, vector<128x4xf32>
    %cst_16 = arith.constant dense<0.000000e+00> : vector<128x4xf32>
    %28 = tpu.matmul %26, %27, %cst_16 {dimension_numbers = #tpu.dot_dimension_numbers<[1], [0], [0], [1], [0, 0, 1, 1], [], []>} : vector<128x128xf32>, vector<128x4xf32>, vector<128x4xf32> -> vector<128x4xf32>
    %cst_17 = arith.constant -1.000000e+01 : f32
    %cst_18 = arith.constant 1.000000e+01 : f32
    %29 = vector.broadcast %cst_17 : f32 to vector<128x4xf32>
    %30 = arith.maximumf %29, %28 : vector<128x4xf32>
    %31 = vector.broadcast %cst_18 : f32 to vector<128x4xf32>
    %32 = arith.minimumf %31, %30 : vector<128x4xf32>
    %33 = math.exp %32 : vector<128x4xf32>
    %c0_19 = arith.constant 0 : index
    %c0_20 = arith.constant 0 : index
    %34 = vector.load %arg9[%c0_19, %c0_20] : memref<4x128xf32, #tpu.memory_space<vmem>>, vector<4x128xf32>
    %cst_21 = arith.constant dense<0.000000e+00> : vector<128x128xf32>
    %35 = tpu.matmul %33, %34, %cst_21 {dimension_numbers = #tpu.dot_dimension_numbers<[1], [0], [0], [1], [0, 0, 1, 1], [], []>} : vector<128x4xf32>, vector<4x128xf32>, vector<128x128xf32> -> vector<128x128xf32>
    %36 = arith.mulf %35, %25 : vector<128x128xf32>
    %c0_22 = arith.constant 0 : index
    %c0_23 = arith.constant 0 : index
    %c0_24 = arith.constant 0 : index
    %37 = vector.load %arg10[%c0_22, %c0_23, %c0_24] : memref<1x16x4xf32, #tpu.memory_space<vmem>>, vector<1x16x4xf32>
    %38 = vector.shape_cast %37 : vector<1x16x4xf32> to vector<16x4xf32>
    %cst_25 = arith.constant dense<0.000000e+00> : vector<16x4xf32>
    %39 = tpu.matmul %19, %33, %cst_25 {dimension_numbers = #tpu.dot_dimension_numbers<[1], [0], [0], [1], [0, 0, 1, 1], [], []>} : vector<16x128xf32>, vector<128x4xf32>, vector<16x4xf32> -> vector<16x4xf32>
    %40 = arith.addf %38, %39 : vector<16x4xf32>
    %c0_26 = arith.constant 0 : index
    %c0_27 = arith.constant 0 : index
    %c0_28 = arith.constant 0 : index
    %41 = vector.load %arg10[%c0_26, %c0_27, %c0_28] : memref<1x16x4xf32, #tpu.memory_space<vmem>>, vector<1x16x4xf32>
    %42 = vector.shape_cast %41 : vector<1x16x4xf32> to vector<16x4xf32>
    %43 = vector.shape_cast %40 : vector<16x4xf32> to vector<1x16x4xf32>
    tpu.vector_store %arg10[%c0_26, %c0_27, %c0_28], %43 {strides = array<i32>} : memref<1x16x4xf32, #tpu.memory_space<vmem>>, vector<1x16x4xf32>,
    %c0_29 = arith.constant 0 : index
    %c0_30 = arith.constant 0 : index
    %c0_31 = arith.constant 0 : index
    %44 = vector.load %arg11[%c0_29, %c0_30, %c0_31] : memref<1x16x128xf32, #tpu.memory_space<vmem>>, vector<1x16x128xf32>
    %45 = vector.shape_cast %44 : vector<1x16x128xf32> to vector<16x128xf32>
    %cst_32 = arith.constant dense<0.000000e+00> : vector<16x128xf32>
    %46 = tpu.matmul %19, %36, %cst_32 {dimension_numbers = #tpu.dot_dimension_numbers<[1], [0], [0], [1], [0, 0, 1, 1], [], []>} : vector<16x128xf32>, vector<128x128xf32>, vector<16x128xf32> -> vector<16x128xf32>
    %47 = arith.addf %45, %46 : vector<16x128xf32>
    %c0_33 = arith.constant 0 : index
    %c0_34 = arith.constant 0 : index
    %c0_35 = arith.constant 0 : index
    %48 = vector.load %arg11[%c0_33, %c0_34, %c0_35] : memref<1x16x128xf32, #tpu.memory_space<vmem>>, vector<1x16x128xf32>
    %49 = vector.shape_cast %48 : vector<1x16x128xf32> to vector<16x128xf32>
    %50 = vector.shape_cast %47 : vector<16x128xf32> to vector<1x16x128xf32>
    tpu.vector_store %arg11[%c0_33, %c0_34, %c0_35], %50 {strides = array<i32>} : memref<1x16x128xf32, #tpu.memory_space<vmem>>, vector<1x16x128xf32>,
    return
  }
  func.func @transform_0(%arg0: i32, %arg1: i32) -> (i32, i32) {
    %c1_i32 = arith.constant 1 : i32
    %0 = arith.muli %arg0, %c1_i32 : i32
    %1 = arith.addi %0, %arg1 : i32
    %c0_i32 = arith.constant 0 : i32
    %c0_i32_0 = arith.constant 0 : i32
    return %1, %c0_i32 : i32, i32
  }
  func.func @transform_1(%arg0: i32, %arg1: i32) -> (i32, i32) {
    %c1_i32 = arith.constant 1 : i32
    %0 = arith.muli %arg0, %c1_i32 : i32
    %1 = arith.addi %0, %arg1 : i32
    %c0_i32 = arith.constant 0 : i32
    %c0_i32_0 = arith.constant 0 : i32
    return %1, %c0_i32 : i32, i32
  }
  func.func @transform_2(%arg0: i32, %arg1: i32) -> (i32, i32) {
    %c1_i32 = arith.constant 1 : i32
    %0 = arith.muli %arg0, %c1_i32 : i32
    %1 = arith.addi %0, %arg1 : i32
    %c0_i32 = arith.constant 0 : i32
    %c0_i32_0 = arith.constant 0 : i32
    return %c0_i32, %1 : i32, i32
  }
  func.func @transform_3(%arg0: i32, %arg1: i32) -> (i32, i32) {
    %c0_i32 = arith.constant 0 : i32
    %c0_i32_0 = arith.constant 0 : i32
    %c0_i32_1 = arith.constant 0 : i32
    return %c0_i32, %c0_i32_0 : i32, i32
  }
  func.func @transform_4(%arg0: i32, %arg1: i32) -> (i32, i32) {
    %c0_i32 = arith.constant 0 : i32
    %c0_i32_0 = arith.constant 0 : i32
    %c0_i32_1 = arith.constant 0 : i32
    return %c0_i32, %c0_i32_0 : i32, i32
  }
  func.func @transform_5(%arg0: i32, %arg1: i32) -> (i32, i32) {
    %c0_i32 = arith.constant 0 : i32
    %c0_i32_0 = arith.constant 0 : i32
    %c0_i32_1 = arith.constant 0 : i32
    return %c0_i32, %c0_i32_0 : i32, i32
  }
  func.func @transform_6(%arg0: i32, %arg1: i32) -> (i32, i32) {
    %c0_i32 = arith.constant 0 : i32
    %c0_i32_0 = arith.constant 0 : i32
    %c0_i32_1 = arith.constant 0 : i32
    return %c0_i32, %c0_i32_0 : i32, i32
  }
  func.func @transform_7(%arg0: i32, %arg1: i32) -> (i32, i32) {
    %c0_i32 = arith.constant 0 : i32
    %c0_i32_0 = arith.constant 0 : i32
    %c0_i32_1 = arith.constant 0 : i32
    return %c0_i32, %c0_i32_0 : i32, i32
  }
  func.func @transform_8(%arg0: i32, %arg1: i32) -> (i32, i32, i32) {
    %c0_i32 = arith.constant 0 : i32
    %c0_i32_0 = arith.constant 0 : i32
    %c0_i32_1 = arith.constant 0 : i32
    return %arg0, %c0_i32, %c0_i32_0 : i32, i32, i32
  }
  func.func @transform_9(%arg0: i32, %arg1: i32) -> (i32, i32, i32) {
    %c0_i32 = arith.constant 0 : i32
    %c0_i32_0 = arith.constant 0 : i32
    %c0_i32_1 = arith.constant 0 : i32
    return %arg0, %c0_i32, %c0_i32_0 : i32, i32, i32
  }
}

module attributes {stable_mosaic.version = 11 : i64} {
  func.func @_gt_finalize_kernel(%arg0: i32, %arg1: memref<2x16x4xf32, #tpu.memory_space<vmem>>, %arg2: memref<2x16x128xf32, #tpu.memory_space<vmem>>, %arg3: memref<16x128xf32, #tpu.memory_space<vmem>>, %arg4: memref<4x128xf32, #tpu.memory_space<vmem>>, %arg5: memref<1x128xf32, #tpu.memory_space<vmem>>, %arg6: memref<1x128xf32, #tpu.memory_space<vmem>>, %arg7: memref<16x128xf32, #tpu.memory_space<vmem>>) attributes {dimension_semantics = [#tpu.dimension_semantics<parallel>], iteration_bounds = array<i64: 1>, scalar_prefetch = 0 : i64, scratch_operands = 0 : i64, tpu.core_type = #tpu.core_type<tc>, window_params = [{transform_indices = @transform_0, window_bounds = array<i64: 2, 16, 4>}, {transform_indices = @transform_1, window_bounds = array<i64: 2, 16, 128>}, {transform_indices = @transform_2, window_bounds = array<i64: 16, 128>}, {pipeline_mode = #tpu.pipeline_mode<synchronous>, transform_indices = @transform_3, window_bounds = array<i64: 4, 128>}, {pipeline_mode = #tpu.pipeline_mode<synchronous>, transform_indices = @transform_4, window_bounds = array<i64: 1, 128>}, {pipeline_mode = #tpu.pipeline_mode<synchronous>, transform_indices = @transform_5, window_bounds = array<i64: 1, 128>}, {transform_indices = @transform_6, window_bounds = array<i64: 16, 128>}]} {
    %c0 = arith.constant 0 : index
    %c0_0 = arith.constant 0 : index
    %c0_1 = arith.constant 0 : index
    %0 = vector.load %arg1[%c0, %c0_0, %c0_1] : memref<2x16x4xf32, #tpu.memory_space<vmem>>, vector<2x16x4xf32>
    %cst = arith.constant dense<0.000000e+00> : vector<16x4xf32>
    %1 = vector.multi_reduction <add>, %0, %cst [0] : vector<2x16x4xf32> to vector<16x4xf32>
    %c0_2 = arith.constant 0 : index
    %c0_3 = arith.constant 0 : index
    %c0_4 = arith.constant 0 : index
    %2 = vector.load %arg2[%c0_2, %c0_3, %c0_4] : memref<2x16x128xf32, #tpu.memory_space<vmem>>, vector<2x16x128xf32>
    %cst_5 = arith.constant dense<0.000000e+00> : vector<16x128xf32>
    %3 = vector.multi_reduction <add>, %2, %cst_5 [0] : vector<2x16x128xf32> to vector<16x128xf32>
    %c0_6 = arith.constant 0 : index
    %c0_7 = arith.constant 0 : index
    %4 = vector.load %arg4[%c0_6, %c0_7] : memref<4x128xf32, #tpu.memory_space<vmem>>, vector<4x128xf32>
    %cst_8 = arith.constant dense<0.000000e+00> : vector<16x128xf32>
    %5 = tpu.matmul %1, %4, %cst_8 {dimension_numbers = #tpu.dot_dimension_numbers<[1], [0], [0], [1], [0, 0, 1, 1], [], []>} : vector<16x4xf32>, vector<4x128xf32>, vector<16x128xf32> -> vector<16x128xf32>
    %cst_9 = arith.constant 9.99999993E-9 : f32
    %6 = vector.broadcast %cst_9 : f32 to vector<16x128xf32>
    %7 = arith.addf %5, %6 : vector<16x128xf32>
    %8 = arith.divf %3, %7 : vector<16x128xf32>
    %c0_10 = arith.constant 0 : index
    %c0_11 = arith.constant 0 : index
    %9 = vector.load %arg3[%c0_10, %c0_11] : memref<16x128xf32, #tpu.memory_space<vmem>>, vector<16x128xf32>
    %10 = arith.addf %8, %9 : vector<16x128xf32>
    %cst_12 = arith.constant dense<0.000000e+00> : vector<16xf32>
    %11 = vector.multi_reduction <add>, %10, %cst_12 [1] : vector<16x128xf32> to vector<16xf32>
    %12 = vector.shape_cast %11 : vector<16xf32> to vector<16x1xf32>
    %cst_13 = arith.constant 3.125000e-02 : f32
    %13 = vector.broadcast %cst_13 : f32 to vector<16x1xf32>
    %14 = arith.mulf %12, %13 : vector<16x1xf32>
    %15 = arith.mulf %10, %10 : vector<16x128xf32>
    %cst_14 = arith.constant dense<0.000000e+00> : vector<16xf32>
    %16 = vector.multi_reduction <add>, %15, %cst_14 [1] : vector<16x128xf32> to vector<16xf32>
    %17 = vector.shape_cast %16 : vector<16xf32> to vector<16x1xf32>
    %cst_15 = arith.constant 3.125000e-02 : f32
    %18 = vector.broadcast %cst_15 : f32 to vector<16x1xf32>
    %19 = arith.mulf %17, %18 : vector<16x1xf32>
    %20 = arith.mulf %14, %14 : vector<16x1xf32>
    %21 = arith.subf %19, %20 : vector<16x1xf32>
    %22 = vector.broadcast %14 : vector<16x1xf32> to vector<16x128xf32>
    %23 = arith.subf %10, %22 : vector<16x128xf32>
    %cst_16 = arith.constant 9.99999997E-7 : f32
    %24 = vector.broadcast %cst_16 : f32 to vector<16x1xf32>
    %25 = arith.addf %21, %24 : vector<16x1xf32>
    %26 = math.rsqrt %25 : vector<16x1xf32>
    %27 = vector.broadcast %26 : vector<16x1xf32> to vector<16x128xf32>
    %28 = arith.mulf %23, %27 : vector<16x128xf32>
    %c0_17 = arith.constant 0 : index
    %c0_18 = arith.constant 0 : index
    %29 = vector.load %arg5[%c0_17, %c0_18] : memref<1x128xf32, #tpu.memory_space<vmem>>, vector<1x128xf32>
    %30 = vector.broadcast %29 : vector<1x128xf32> to vector<16x128xf32>
    %31 = arith.mulf %28, %30 : vector<16x128xf32>
    %c0_19 = arith.constant 0 : index
    %c0_20 = arith.constant 0 : index
    %32 = vector.load %arg6[%c0_19, %c0_20] : memref<1x128xf32, #tpu.memory_space<vmem>>, vector<1x128xf32>
    %33 = vector.broadcast %32 : vector<1x128xf32> to vector<16x128xf32>
    %34 = arith.addf %31, %33 : vector<16x128xf32>
    %c0_21 = arith.constant 0 : index
    %c0_22 = arith.constant 0 : index
    %35 = vector.load %arg7[%c0_21, %c0_22] : memref<16x128xf32, #tpu.memory_space<vmem>>, vector<16x128xf32>
    tpu.vector_store %arg7[%c0_21, %c0_22], %34 {strides = array<i32>} : memref<16x128xf32, #tpu.memory_space<vmem>>, vector<16x128xf32>,
    return
  }
  func.func @transform_0(%arg0: i32) -> (i32, i32, i32) {
    %c0_i32 = arith.constant 0 : i32
    %c0_i32_0 = arith.constant 0 : i32
    %c0_i32_1 = arith.constant 0 : i32
    return %c0_i32, %arg0, %c0_i32_0 : i32, i32, i32
  }
  func.func @transform_1(%arg0: i32) -> (i32, i32, i32) {
    %c0_i32 = arith.constant 0 : i32
    %c0_i32_0 = arith.constant 0 : i32
    %c0_i32_1 = arith.constant 0 : i32
    return %c0_i32, %arg0, %c0_i32_0 : i32, i32, i32
  }
  func.func @transform_2(%arg0: i32) -> (i32, i32) {
    %c0_i32 = arith.constant 0 : i32
    %c0_i32_0 = arith.constant 0 : i32
    return %arg0, %c0_i32 : i32, i32
  }
  func.func @transform_3(%arg0: i32) -> (i32, i32) {
    %c0_i32 = arith.constant 0 : i32
    %c0_i32_0 = arith.constant 0 : i32
    %c0_i32_1 = arith.constant 0 : i32
    return %c0_i32, %c0_i32_0 : i32, i32
  }
  func.func @transform_4(%arg0: i32) -> (i32, i32) {
    %c0_i32 = arith.constant 0 : i32
    %c0_i32_0 = arith.constant 0 : i32
    %c0_i32_1 = arith.constant 0 : i32
    return %c0_i32, %c0_i32_0 : i32, i32
  }
  func.func @transform_5(%arg0: i32) -> (i32, i32) {
    %c0_i32 = arith.constant 0 : i32
    %c0_i32_0 = arith.constant 0 : i32
    %c0_i32_1 = arith.constant 0 : i32
    return %c0_i32, %c0_i32_0 : i32, i32
  }
  func.func @transform_6(%arg0: i32) -> (i32, i32) {
    %c0_i32 = arith.constant 0 : i32
    %c0_i32_0 = arith.constant 0 : i32
    return %arg0, %c0_i32 : i32, i32
  }
}

</mosaic_0001>

<llo_original>
// kernel: gt_layer_forward.3
$region0: #{gt_layer_forward.3}
  #allocation0 [shape = 'u32[]', space=smem, size = 0x4, offset = 0x4, fixed_abs, tag = 'smem constant byte address 0x4 - core index']
  #allocation1 [shape = 'u32[144,128]{1,0:T(1,128)}', space=vmem, size = 0x12000, scoped, tag = 'internal scratch']
  %s0 = inlined_call_operand.vmem [shape: f32[2,16,4], index: 0, kind: input, shape index: {}]
  %s1 = inlined_call_operand.vmem [shape: f32[2,16,128], index: 1, kind: input, shape index: {}]
  %s2 = inlined_call_operand.vmem [shape: f32[16,128], index: 2, kind: input, shape index: {}]
  %s3 = inlined_call_operand.vmem [shape: f32[4,128], index: 3, kind: input, shape index: {}]
  %s4 = inlined_call_operand.vmem [shape: f32[1,128], index: 4, kind: input, shape index: {}]
  %s5 = inlined_call_operand.vmem [shape: f32[1,128], index: 5, kind: input, shape index: {}]
  %s6 = inlined_call_operand.hbm [shape: f32[16,128], index: 6, kind: output, shape index: {}]
  %s7 = sld [smem:[#allocation0]]
  $region34: #{gt_layer_forward.3} parent=0
    _
  %s9 = ssub.s32 1, %s7
  %s10 = scalar_select 0, %s9, %s7
  $region1: #{gt_layer_forward.3} parent=0
    #allocation2 [shape = 'u8[8192]{0}', space=vmem, size = 0x2000, scoped, tag = 'output window, operand 0, single buffered']
    #allocation3 [shape = 's32[1]{0}', space=sflag, size = 0x4, scoped, tag = 'scoped memory for gt_layer_forward.3']
    %11 = vsyncpa [#allocation3], 0
    // Predicated region
    $region2: #{gt_layer_forward.3} parent=1 // pred_check
      _
    $region3: #{gt_layer_forward.3} parent=1 // pred_check_branch
      %13 = sbr.rel (0) target = $region5
    $region4: #{gt_layer_forward.3} parent=1 // pred_region
      _
    $region5: #{gt_layer_forward.3} parent=1 // pred_fallthru
      _
    // Predicated region
    $region6: #{gt_layer_forward.3} parent=1 // pred_check
      _
    $region7: #{gt_layer_forward.3} parent=1 // pred_check_branch
      %15 = sbr.rel (0) target = $region9
    $region8: #{gt_layer_forward.3} parent=1 // pred_region
      _
    $region9: #{gt_layer_forward.3} parent=1 // pred_fallthru
      _
    // Predicated region
    $region10: #{gt_layer_forward.3} parent=1 // pred_check
      _
    $region11: #{gt_layer_forward.3} parent=1 // pred_check_branch
      %17 = sbr.rel (0) target = $region13
    $region12: #{gt_layer_forward.3} parent=1 // pred_region
      _
    $region13: #{gt_layer_forward.3} parent=1 // pred_fallthru
      _
    // Predicated region
    $region14: #{gt_layer_forward.3} parent=1 // pred_check
      _
    $region15: #{gt_layer_forward.3} parent=1 // pred_check_branch
      %19 = sbr.rel (0) target = $region17
    $region16: #{gt_layer_forward.3} parent=1 // pred_region
      _
    $region17: #{gt_layer_forward.3} parent=1 // pred_fallthru
      _
    // Predicated region
    $region18: #{gt_layer_forward.3} parent=1 // pred_check
      _
    $region19: #{gt_layer_forward.3} parent=1 // pred_check_branch
      %21 = sbr.rel (0) target = $region21
    $region20: #{gt_layer_forward.3} parent=1 // pred_region
      _
    $region21: #{gt_layer_forward.3} parent=1 // pred_fallthru
      _
    // Predicated region
    $region22: #{gt_layer_forward.3} parent=1 // pred_check
      _
    $region23: #{gt_layer_forward.3} parent=1 // pred_check_branch
      %23 = sbr.rel (0) target = $region25
    $region24: #{gt_layer_forward.3} parent=1 // pred_region
      _
    $region25: #{gt_layer_forward.3} parent=1 // pred_fallthru
      _
    %v24 = vld [vmem:[%s0] sm:$0xff]
    %v25 = vld [vmem:[%s0 + $0x8] sm:$0xff]
    %v26 = vld [vmem:[%s0 + $0x10] sm:$0xff]
    %v27 = vld [vmem:[%s0 + $0x18] sm:$0xff]
    %vm28 = vcmask 31744
    %v29 = vsel %vm28, %v24, 0.0
    %v30 = vsel %vm28, %v26, 0.0
    %v31 = vadd.f32 %v29, %v30
    %v32 = vsel %vm28, %v25, 0.0
    %v33 = vsel %vm28, %v27, 0.0
    %v34 = vadd.f32 %v32, %v33
    %v35 = vld [vmem:[%s1] sm:$0xff]
    %v36 = vld [vmem:[%s1 + $0x8] sm:$0xff]
    %v37 = vld [vmem:[%s1 + $0x10] sm:$0xff]
    %v38 = vld [vmem:[%s1 + $0x18] sm:$0xff]
    %v39 = vadd.f32 %v35, %v37
    %v40 = vadd.f32 %v36, %v38
    %v41 = vld [vmem:[%s3] sm:$0xf]
    %v43 = vsel %vm28, %v31, 0
    %v46 = vsel %vm28, %v34, 0
    %vm48 = vcmask 1043456
    %v50 = vsel %vm48, %v41, 0
    %52 = vmatprep.subr.mxu0 0.0
    %53 = vmatpush1.msra.mxu0 0.0
    %54 = vmatprep.subr.mxu0 0.0
    %55 = vmatpush1.msra.mxu0 0.0
    %56 = vmatprep.subr.mxu0 0.0
    %57 = vmatpush1.msra.mxu0 0.0
    %58 = vmatprep.subr.mxu0 0.0
    %59 = vmatpush1.msra.mxu0 0.0
    %60 = vmatprep.subr.mxu0 0.0
    %61 = vmatpush1.msra.mxu0 0.0
    %62 = vmatprep.subr.mxu0 0.0
    %63 = vmatpush1.msra.mxu0 0.0
    %64 = vmatprep.subr.mxu0 0.0
    %65 = vmatpush1.msra.mxu0 0.0
    %66 = vmatprep.subr.mxu0 0.0
    %67 = vmatpush1.msra.mxu0 0.0
    %68 = vmatprep.subr.mxu0 0.0
    %69 = vmatpush1.msra.mxu0 0.0
    %70 = vmatprep.subr.mxu0 0.0
    %71 = vmatpush1.msra.mxu0 0.0
    %72 = vmatprep.subr.mxu0 0.0
    %73 = vmatpush1.msra.mxu0 0.0
    %74 = vmatprep.subr.mxu0 0.0
    %75 = vmatpush1.msra.mxu0 0.0
    %76 = vmatprep.subr.mxu0 0.0
    %77 = vmatpush1.msra.mxu0 0.0
    %78 = vmatprep.subr.mxu0 0.0
    %79 = vmatpush1.msra.mxu0 0.0
    %80 = vmatprep.subr.mxu0 0.0
    %81 = vmatpush1.msra.mxu0 0.0
    %82 = vmatprep.subr.mxu0 0.0
    %83 = vmatpush1.msra.mxu0 %v50
    %84 = vmatprep.subr.mxu0 0.0
    %85 = vmatpush2.msra.mxu0 0.0
    %86 = vmatprep.subr.mxu0 0.0
    %87 = vmatpush2.msra.mxu0 0.0
    %88 = vmatprep.subr.mxu0 0.0
    %89 = vmatpush2.msra.mxu0 0.0
    %90 = vmatprep.subr.mxu0 0.0
    %91 = vmatpush2.msra.mxu0 0.0
    %92 = vmatprep.subr.mxu0 0.0
    %93 = vmatpush2.msra.mxu0 0.0
    %94 = vmatprep.subr.mxu0 0.0
    %95 = vmatpush2.msra.mxu0 0.0
    %96 = vmatprep.subr.mxu0 0.0
    %97 = vmatpush2.msra.mxu0 0.0
    %98 = vmatprep.subr.mxu0 0.0
    %99 = vmatpush2.msra.mxu0 0.0
    %100 = vmatprep.subr.mxu0 0.0
    %101 = vmatpush2.msra.mxu0 0.0
    %102 = vmatprep.subr.mxu0 0.0
    %103 = vmatpush2.msra.mxu0 0.0
    %104 = vmatprep.subr.mxu0 0.0
    %105 = vmatpush2.msra.mxu0 0.0
    %106 = vmatprep.subr.mxu0 0.0
    %107 = vmatpush2.msra.mxu0 0.0
    %108 = vmatprep.subr.mxu0 0.0
    %109 = vmatpush2.msra.mxu0 0.0
    %110 = vmatprep.subr.mxu0 0.0
    %111 = vmatpush2.msra.mxu0 0.0
    %112 = vmatprep.subr.mxu0 0.0
    %113 = vmatpush2.msra.mxu0 0.0
    %114 = vmatprep.subr.mxu0 0.0
    %115 = vmatpush2.msra.mxu0 0.0
    %116 = vmatprep.mubr.f32.mxu0 0.0
    %117 = vmatmul.mubr.f32.gmra.mxu0 %v43
    %v118 = vpop.f32.mrf.mxu0
    %v119 = vadd.f32 1e-08, %v118
    %v120 = vpop.f32.mrf.mxu0
    %121 = vmatprep.mubr.f32.mxu0 0.0
    %122 = vmatmul.mubr.f32.gmra.mxu0 %v46
    %v123 = vpop.f32.mrf.mxu0
    %v124 = vadd.f32 1e-08, %v123
    %v125 = vpop.f32.mrf.mxu0
    %126 = vdwg.mxu0
    %v127 = vrcp.pop %v119
    %v128 = vmul.f32 %v39, %v127
    %v129 = vrcp.pop %v124
    %v130 = vmul.f32 %v40, %v129
    %v131 = vld [vmem:[%s2] sm:$0xff]
    %v132 = vld [vmem:[%s2 + $0x8] sm:$0xff]
    %v133 = vadd.f32 %v128, %v131
    %v134 = vadd.f32 %v130, %v132
    %135 = vadd.xlane.f32.xlu0 %v133
    %v136 = vpop.xlane.xlu0 %135
    %137 = vadd.xlane.f32.xlu0 %v134
    %v138 = vpop.xlane.xlu0 %137
    %v139 = vmul.f32 %v136, 0.03125
    %v140 = vmul.f32 %v138, 0.03125
    %v141 = vmul.f32 %v133, %v133
    %v142 = vmul.f32 %v134, %v134
    %143 = vadd.xlane.f32.xlu0 %v141
    %v144 = vpop.xlane.xlu0 %143
    %145 = vadd.xlane.f32.xlu0 %v142
    %v146 = vpop.xlane.xlu0 %145
    %v147 = vmul.f32 %v144, 0.03125
    %v148 = vmul.f32 %v146, 0.03125
    %v149 = vmul.f32 %v139, %v139
    %v150 = vmul.f32 %v140, %v140
    %v151 = vsub.f32 %v147, %v149
    %v152 = vsub.f32 %v148, %v150
    %v153 = vsub.f32 %v133, %v139
    %v154 = vsub.f32 %v134, %v140
    %v155 = vadd.f32 %v151, 1e-06
    %v156 = vadd.f32 %v152, 1e-06
    %v157 = vrsqrt.pop %v155
    %v158 = vrsqrt.pop %v156
    %v159 = vmul.f32 %v153, %v157
    %v160 = vmul.f32 %v154, %v158
    %v161 = vld [vmem:[%s4] sm:$0x1]
    %v163 = vlaneseq
    %v164 = vshrl.u32 %v163, 7
    %v165 = vsub.s32 0, %v164
    %v166 = vrot.slane %v161, %v165
    %v168 = vmul.f32 %v159, %v166
    %v169 = vmul.f32 %v160, %v166
    %v170 = vld [vmem:[%s5] sm:$0x1]
    %v172 = vlaneseq
    %v173 = vshrl.u32 %v172, 7
    %v174 = vsub.s32 0, %v173
    %v175 = vrot.slane %v170, %v174
    %v177 = vadd.f32 %v168, %v175
    %v178 = vadd.f32 %v169, %v175
    %179 = vst [vmem:[#allocation2] sm:$0xff] %v177
    %180 = vst [vmem:[#allocation2 + $0x8] sm:$0xff] %v178
    // Predicated region
    $region26: #{gt_layer_forward.3} parent=1 // pred_check
      _
    $region27: #{gt_layer_forward.3} parent=1 // pred_check_branch
      %182 = sbr.rel (0) target = $region29
    $region28: #{gt_layer_forward.3} parent=1 // pred_region
      %s184 = ssub.s32 256, 256
      %185 = vsyncadd [#allocation3], %s184
      %s186 = sshll.u32 [#allocation2], 4
      %s187 = int_to_ptr.vmem [resolvable:$true] %s186
      %192 = dma.vmem_to_hbm [thread:$0]  %s187, 256, %s6, [#allocation3], 128, 128, 8
    $region29: #{gt_layer_forward.3} parent=1 // pred_fallthru
      _
    // Predicated region
    $region30: #{gt_layer_forward.3} parent=1 // pred_check
      _
    $region31: #{gt_layer_forward.3} parent=1 // pred_check_branch
      %194 = sbr.rel (0) target = $region33
    $region32: #{gt_layer_forward.3} parent=1 // pred_region
      %195 = dma.done [#allocation3], 256
    $region33: #{gt_layer_forward.3} parent=1 // pred_fallthru
      _
    %196 = vsyncpa [#allocation3], 1

// kernel: gt_layer_forward.2
$region0: #{gt_layer_forward.2}
  #allocation0 [shape = 'u32[]', space=smem, size = 0x4, offset = 0x4, fixed_abs, tag = 'smem constant byte address 0x4 - core index']
  #allocation1 [shape = 'u32[144,128]{1,0:T(1,128)}', space=vmem, size = 0x12000, scoped, tag = 'internal scratch']
  %s0 = inlined_call_operand.vmem [shape: s32[256,1], index: 0, kind: input, shape index: {}]
  %s1 = inlined_call_operand.vmem [shape: s32[256,1], index: 1, kind: input, shape index: {}]
  %s2 = inlined_call_operand.vmem [shape: s32[1,256], index: 2, kind: input, shape index: {}]
  %s3 = inlined_call_operand.vmem [shape: f32[16,128], index: 3, kind: input, shape index: {}]
  %s4 = inlined_call_operand.vmem [shape: f32[16,128], index: 4, kind: input, shape index: {}]
  %s5 = inlined_call_operand.vmem [shape: f32[16,128], index: 5, kind: input, shape index: {}]
  %s6 = inlined_call_operand.vmem [shape: f32[128,4], index: 6, kind: input, shape index: {}]
  %s7 = inlined_call_operand.vmem [shape: f32[4,128], index: 7, kind: input, shape index: {}]
  %s8 = inlined_call_operand.vmem [shape: f32[2,16,4], index: 8, kind: output, shape index: {0}]
  %s9 = inlined_call_operand.vmem [shape: f32[2,16,128], index: 9, kind: output, shape index: {1}]
  %10 = xla_tuple %s8, %s9
  %s11 = sld [smem:[#allocation0]]
  $region77: #{gt_layer_forward.2} parent=0
    _
  %s13 = ssub.s32 1, %s11
  %s14 = scalar_select 0, %s13, %s11
  loop: start=0, step=1, limit=4
  $region2: #{gt_layer_forward.2} parent=0 // loop_pre_header
    _
  $region3: #{gt_layer_forward.2} parent=0 // loop_header
    %s16 = sphi 0, %s20
    %p17 = scmp.ge.s32.totalorder %s16, 4
    %s23 = sphi 0, %s35
    %s24 = sphi 0, %s31
    %s25 = sphi 0, %s23
    %s26 = sphi 0, %s24
    %s27 = sphi 0, %s25
    %s28 = sphi 0, %s26
    %s40 = sphi 0, %s42
    %s43 = sphi 0, %s40
    %s44 = sphi 0, %s43
    %s60 = sphi 0, %s44
    %s68 = sphi 0, %s70
    %s71 = sphi 0, %s68
    %s72 = sphi 0, %s71
    %s88 = sphi 0, %s72
    %s96 = sphi 0, %s98
    %s99 = sphi 0, %s96
    %s100 = sphi 0, %s99
    %s116 = sphi 0, %s100
    %s120 = sphi 0, %s120
    %s122 = sphi 0, %s120
    %s123 = sphi 0, %s122
    %s137 = sphi 0, %s123
    %s141 = sphi 0, %s141
    %s143 = sphi 0, %s141
    %s144 = sphi 0, %s143
    %s158 = sphi 0, %s144
    %s162 = sphi 0, %s162
    %s164 = sphi 0, %s162
    %s165 = sphi 0, %s164
    %s179 = sphi 0, %s165
    %s183 = sphi 0, %s183
    %s185 = sphi 0, %s183
    %s186 = sphi 0, %s185
    %s200 = sphi 0, %s186
    %s204 = sphi 0, %s204
    %s206 = sphi 0, %s204
    %s207 = sphi 0, %s206
    %s221 = sphi 0, %s207
    %s227 = sphi 0, %s229
    %s230 = sphi 0, %s227
    %s231 = sphi 0, %s230
    %s247 = sphi 0, %s231
    %s253 = sphi 0, %s255
    %s256 = sphi 0, %s253
    %s257 = sphi 0, %s256
    %s273 = sphi 0, %s257
  $region4: #{gt_layer_forward.2} parent=0 // loop_header_branch
    %19 = sbr.rel (%p17) target = $region8
  $region5: #{gt_layer_forward.2} parent=0 // loop_body
    %s21 = ssub.s32 %s16, 1
    %s22 = ssub.s32 %s16, 2
    %s29 = sadd.s32 1, %s24
    %p30 = scmp.ge.s32.totalorder %s29, 1
    %s31 = scalar_select %p30, 0, %s29
    %s32 = sadd.s32 1, %s23
    %s33 = scalar_select %p30, %s32, %s23
    %p34 = scmp.ge.s32.totalorder %s33, 2
    %s35 = scalar_select %p34, 0, %s33
    %s36 = sadd.s32 %s23, %s24
    %s37 = sadd.s32 %s35, %s31
    %s38 = ssub.s32 %s36, %s37
    %p39 = scmp.eq.s32.totalorder %s38, 0
    %s41 = sadd.s32 %s40, 1
    %s42 = scalar_select %p39, %s40, %s41
    %p45 = pneg %p39
    %p46 = scmp.eq.s32.totalorder %s16, 1
    %p47 = por %p45, %p46
    %p48 = scmp.ne.s32.totalorder %s40, %s43
    %p49 = scmp.eq.s32.totalorder %s16, 0
    %p50 = por %p48, %p49
    %p51 = scmp.ne.s32.totalorder %s40, %s43
    %p52 = scmp.eq.s32.totalorder %s21, 1
    %p53 = por %p51, %p52
    %p54 = scmp.ne.s32.totalorder %s43, %s44
    %p55 = scmp.eq.s32.totalorder %s21, 0
    %p56 = por %p54, %p55
    %p57 = scmp.ne.s32.totalorder %s43, %s44
    %p58 = scmp.eq.s32.totalorder %s22, 1
    %p59 = por %p57, %p58
    %p61 = scmp.ne.s32.totalorder %s44, %s60
    %p62 = scmp.eq.s32.totalorder %s22, 0
    %p63 = por %p61, %p62
    %s64 = sadd.s32 %s23, %s24
    %s65 = sadd.s32 %s35, %s31
    %s66 = ssub.s32 %s64, %s65
    %p67 = scmp.eq.s32.totalorder %s66, 0
    %s69 = sadd.s32 %s68, 1
    %s70 = scalar_select %p67, %s68, %s69
    %p73 = pneg %p67
    %p74 = scmp.eq.s32.totalorder %s16, 1
    %p75 = por %p73, %p74
    %p76 = scmp.ne.s32.totalorder %s68, %s71
    %p77 = scmp.eq.s32.totalorder %s16, 0
    %p78 = por %p76, %p77
    %p79 = scmp.ne.s32.totalorder %s68, %s71
    %p80 = scmp.eq.s32.totalorder %s21, 1
    %p81 = por %p79, %p80
    %p82 = scmp.ne.s32.totalorder %s71, %s72
    %p83 = scmp.eq.s32.totalorder %s21, 0
    %p84 = por %p82, %p83
    %p85 = scmp.ne.s32.totalorder %s71, %s72
    %p86 = scmp.eq.s32.totalorder %s22, 1
    %p87 = por %p85, %p86
    %p89 = scmp.ne.s32.totalorder %s72, %s88
    %p90 = scmp.eq.s32.totalorder %s22, 0
    %p91 = por %p89, %p90
    %s92 = sadd.s32 %s23, %s24
    %s93 = sadd.s32 %s35, %s31
    %s94 = ssub.s32 %s92, %s93
    %p95 = scmp.eq.s32.totalorder %s94, 0
    %s97 = sadd.s32 %s96, 1
    %s98 = scalar_select %p95, %s96, %s97
    %p101 = pneg %p95
    %p102 = scmp.eq.s32.totalorder %s16, 1
    %p103 = por %p101, %p102
    %p104 = scmp.ne.s32.totalorder %s96, %s99
    %p105 = scmp.eq.s32.totalorder %s16, 0
    %p106 = por %p104, %p105
    %p107 = scmp.ne.s32.totalorder %s96, %s99
    %p108 = scmp.eq.s32.totalorder %s21, 1
    %p109 = por %p107, %p108
    %p110 = scmp.ne.s32.totalorder %s99, %s100
    %p111 = scmp.eq.s32.totalorder %s21, 0
    %p112 = por %p110, %p111
    %p113 = scmp.ne.s32.totalorder %s99, %s100
    %p114 = scmp.eq.s32.totalorder %s22, 1
    %p115 = por %p113, %p114
    %p117 = scmp.ne.s32.totalorder %s100, %s116
    %p118 = scmp.eq.s32.totalorder %s22, 0
    %p119 = por %p117, %p118
    %s121 = sadd.s32 %s120, 1
    %p124 = scmp.eq.s32.totalorder %s16, 1
    %p125 = scmp.ne.s32.totalorder %s120, %s122
    %p126 = scmp.eq.s32.totalorder %s16, 0
    %p127 = por %p125, %p126
    %p128 = scmp.ne.s32.totalorder %s120, %s122
    %p129 = scmp.eq.s32.totalorder %s21, 1
    %p130 = por %p128, %p129
    %p131 = scmp.ne.s32.totalorder %s122, %s123
    %p132 = scmp.eq.s32.totalorder %s21, 0
    %p133 = por %p131, %p132
    %p134 = scmp.ne.s32.totalorder %s122, %s123
    %p135 = scmp.eq.s32.totalorder %s22, 1
    %p136 = por %p134, %p135
    %p138 = scmp.ne.s32.totalorder %s123, %s137
    %p139 = scmp.eq.s32.totalorder %s22, 0
    %p140 = por %p138, %p139
    %s142 = sadd.s32 %s141, 1
    %p145 = scmp.eq.s32.totalorder %s16, 1
    %p146 = scmp.ne.s32.totalorder %s141, %s143
    %p147 = scmp.eq.s32.totalorder %s16, 0
    %p148 = por %p146, %p147
    %p149 = scmp.ne.s32.totalorder %s141, %s143
    %p150 = scmp.eq.s32.totalorder %s21, 1
    %p151 = por %p149, %p150
    %p152 = scmp.ne.s32.totalorder %s143, %s144
    %p153 = scmp.eq.s32.totalorder %s21, 0
    %p154 = por %p152, %p153
    %p155 = scmp.ne.s32.totalorder %s143, %s144
    %p156 = scmp.eq.s32.totalorder %s22, 1
    %p157 = por %p155, %p156
    %p159 = scmp.ne.s32.totalorder %s144, %s158
    %p160 = scmp.eq.s32.totalorder %s22, 0
    %p161 = por %p159, %p160
    %s163 = sadd.s32 %s162, 1
    %p166 = scmp.eq.s32.totalorder %s16, 1
    %p167 = scmp.ne.s32.totalorder %s162, %s164
    %p168 = scmp.eq.s32.totalorder %s16, 0
    %p169 = por %p167, %p168
    %p170 = scmp.ne.s32.totalorder %s162, %s164
    %p171 = scmp.eq.s32.totalorder %s21, 1
    %p172 = por %p170, %p171
    %p173 = scmp.ne.s32.totalorder %s164, %s165
    %p174 = scmp.eq.s32.totalorder %s21, 0
    %p175 = por %p173, %p174
    %p176 = scmp.ne.s32.totalorder %s164, %s165
    %p177 = scmp.eq.s32.totalorder %s22, 1
    %p178 = por %p176, %p177
    %p180 = scmp.ne.s32.totalorder %s165, %s179
    %p181 = scmp.eq.s32.totalorder %s22, 0
    %p182 = por %p180, %p181
    %s184 = sadd.s32 %s183, 1
    %p187 = scmp.eq.s32.totalorder %s16, 1
    %p188 = scmp.ne.s32.totalorder %s183, %s185
    %p189 = scmp.eq.s32.totalorder %s16, 0
    %p190 = por %p188, %p189
    %p191 = scmp.ne.s32.totalorder %s183, %s185
    %p192 = scmp.eq.s32.totalorder %s21, 1
    %p193 = por %p191, %p192
    %p194 = scmp.ne.s32.totalorder %s185, %s186
    %p195 = scmp.eq.s32.totalorder %s21, 0
    %p196 = por %p194, %p195
    %p197 = scmp.ne.s32.totalorder %s185, %s186
    %p198 = scmp.eq.s32.totalorder %s22, 1
    %p199 = por %p197, %p198
    %p201 = scmp.ne.s32.totalorder %s186, %s200
    %p202 = scmp.eq.s32.totalorder %s22, 0
    %p203 = por %p201, %p202
    %s205 = sadd.s32 %s204, 1
    %p208 = scmp.eq.s32.totalorder %s16, 1
    %p209 = scmp.ne.s32.totalorder %s204, %s206
    %p210 = scmp.eq.s32.totalorder %s16, 0
    %p211 = por %p209, %p210
    %p212 = scmp.ne.s32.totalorder %s204, %s206
    %p213 = scmp.eq.s32.totalorder %s21, 1
    %p214 = por %p212, %p213
    %p215 = scmp.ne.s32.totalorder %s206, %s207
    %p216 = scmp.eq.s32.totalorder %s21, 0
    %p217 = por %p215, %p216
    %p218 = scmp.ne.s32.totalorder %s206, %s207
    %p219 = scmp.eq.s32.totalorder %s22, 1
    %p220 = por %p218, %p219
    %p222 = scmp.ne.s32.totalorder %s207, %s221
    %p223 = scmp.eq.s32.totalorder %s22, 0
    %p224 = por %p222, %p223
    %s225 = ssub.s32 %s23, %s35
    %p226 = scmp.eq.s32.totalorder %s225, 0
    %s228 = sadd.s32 %s227, 1
    %s229 = scalar_select %p226, %s227, %s228
    %p232 = pneg %p226
    %p233 = scmp.eq.s32.totalorder %s16, 1
    %p234 = por %p232, %p233
    %p235 = scmp.ne.s32.totalorder %s227, %s230
    %p236 = scmp.eq.s32.totalorder %s16, 0
    %p237 = por %p235, %p236
    %p238 = scmp.ne.s32.totalorder %s227, %s230
    %p239 = scmp.eq.s32.totalorder %s21, 1
    %p240 = por %p238, %p239
    %p241 = scmp.ne.s32.totalorder %s230, %s231
    %p242 = scmp.eq.s32.totalorder %s21, 0
    %p243 = por %p241, %p242
    %p244 = scmp.ne.s32.totalorder %s230, %s231
    %p245 = scmp.eq.s32.totalorder %s22, 1
    %p246 = por %p244, %p245
    %p248 = scmp.ne.s32.totalorder %s231, %s247
    %p249 = scmp.eq.s32.totalorder %s22, 0
    %p250 = por %p248, %p249
    %s251 = ssub.s32 %s23, %s35
    %p252 = scmp.eq.s32.totalorder %s251, 0
    %s254 = sadd.s32 %s253, 1
    %s255 = scalar_select %p252, %s253, %s254
    %p258 = pneg %p252
    %p259 = scmp.eq.s32.totalorder %s16, 1
    %p260 = por %p258, %p259
    %p261 = scmp.ne.s32.totalorder %s253, %s256
    %p262 = scmp.eq.s32.totalorder %s16, 0
    %p263 = por %p261, %p262
    %p264 = scmp.ne.s32.totalorder %s253, %s256
    %p265 = scmp.eq.s32.totalorder %s21, 1
    %p266 = por %p264, %p265
    %p267 = scmp.ne.s32.totalorder %s256, %s257
    %p268 = scmp.eq.s32.totalorder %s21, 0
    %p269 = por %p267, %p268
    %p270 = scmp.ne.s32.totalorder %s256, %s257
    %p271 = scmp.eq.s32.totalorder %s22, 1
    %p272 = por %p270, %p271
    %p274 = scmp.ne.s32.totalorder %s257, %s273
    %p275 = scmp.eq.s32.totalorder %s22, 0
    %p276 = por %p274, %p275
    %p277 = scmp.le.s32.totalorder 1, %s16
    %p278 = scmp.lt.s32.totalorder %s16, 3
    %p279 = pnand %p277, %p278
    %p280 = pneg %p279
    // Predicated region
    $region9: #{gt_layer_forward.2} parent=5 // pred_check
      _
    $region10: #{gt_layer_forward.2} parent=5 // pred_check_branch
      %282 = sbr.rel (%p279) target = $region12
    $region11: #{gt_layer_forward.2} parent=5 // pred_region
      %s283 = ssub.s32 %s16, 1
      // Predicated region
      $region13: #{gt_layer_forward.2} parent=11 // pred_check
        %p284 = pneg %p133
      $region14: #{gt_layer_forward.2} parent=11 // pred_check_branch
        %286 = sbr.rel (%p284) target = $region16
      $region15: #{gt_layer_forward.2} parent=11 // pred_region
        _
      $region16: #{gt_layer_forward.2} parent=11 // pred_fallthru
        _
      // Predicated region
      $region17: #{gt_layer_forward.2} parent=11 // pred_check
        %p287 = pneg %p154
      $region18: #{gt_layer_forward.2} parent=11 // pred_check_branch
        %289 = sbr.rel (%p287) target = $region20
      $region19: #{gt_layer_forward.2} parent=11 // pred_region
        _
      $region20: #{gt_layer_forward.2} parent=11 // pred_fallthru
        _
      // Predicated region
      $region21: #{gt_layer_forward.2} parent=11 // pred_check
        %p290 = pneg %p175
      $region22: #{gt_layer_forward.2} parent=11 // pred_check_branch
        %292 = sbr.rel (%p290) target = $region24
      $region23: #{gt_layer_forward.2} parent=11 // pred_region
        _
      $region24: #{gt_layer_forward.2} parent=11 // pred_fallthru
        _
      // Predicated region
      $region25: #{gt_layer_forward.2} parent=11 // pred_check
        %p293 = pneg %p196
      $region26: #{gt_layer_forward.2} parent=11 // pred_check_branch
        %295 = sbr.rel (%p293) target = $region28
      $region27: #{gt_layer_forward.2} parent=11 // pred_region
        _
      $region28: #{gt_layer_forward.2} parent=11 // pred_fallthru
        _
      // Predicated region
      $region29: #{gt_layer_forward.2} parent=11 // pred_check
        %p296 = pneg %p217
      $region30: #{gt_layer_forward.2} parent=11 // pred_check_branch
        %298 = sbr.rel (%p296) target = $region32
      $region31: #{gt_layer_forward.2} parent=11 // pred_region
        _
      $region32: #{gt_layer_forward.2} parent=11 // pred_fallthru
        _
    $region12: #{gt_layer_forward.2} parent=5 // pred_fallthru
      _
    %p299 = scmp.lt.s32.totalorder %s16, 2
    // Predicated region
    $region33: #{gt_layer_forward.2} parent=5 // pred_check
      %p300 = pneg %p299
    $region34: #{gt_layer_forward.2} parent=5 // pred_check_branch
      %302 = sbr.rel (%p300) target = $region36
    $region35: #{gt_layer_forward.2} parent=5 // pred_region
      // Predicated region
      $region37: #{gt_layer_forward.2} parent=35 // pred_check
        %p303 = pneg %p50
      $region38: #{gt_layer_forward.2} parent=35 // pred_check_branch
        %305 = sbr.rel (%p303) target = $region40
      $region39: #{gt_layer_forward.2} parent=35 // pred_region
        %s306 = sadd.s32 %s23, %s24
        %s307 = smul.u32 16, %s306
        %p308 = scmp.lt.s32.totalorder %s307, 31
        %s309 = scalar_select %p308, %s307, 31
        %s310 = smul.addr %s309, 8
        %s311 = scalar_lea.vmem %s0, %s310
        %s312 = sadd.s32 %s23, %s24
        %s313 = smul.u32 16, %s312
      $region40: #{gt_layer_forward.2} parent=35 // pred_fallthru
        _
      // Predicated region
      $region41: #{gt_layer_forward.2} parent=35 // pred_check
        %p314 = pneg %p78
      $region42: #{gt_layer_forward.2} parent=35 // pred_check_branch
        %316 = sbr.rel (%p314) target = $region44
      $region43: #{gt_layer_forward.2} parent=35 // pred_region
        %s317 = sadd.s32 %s23, %s24
        %s318 = smul.u32 16, %s317
        %p319 = scmp.lt.s32.totalorder %s318, 31
        %s320 = scalar_select %p319, %s318, 31
        %s321 = smul.addr %s320, 8
        %s322 = scalar_lea.vmem %s1, %s321
        %s323 = sadd.s32 %s23, %s24
        %s324 = smul.u32 16, %s323
      $region44: #{gt_layer_forward.2} parent=35 // pred_fallthru
        _
      // Predicated region
      $region45: #{gt_layer_forward.2} parent=35 // pred_check
        %p325 = pneg %p106
      $region46: #{gt_layer_forward.2} parent=35 // pred_check_branch
        %327 = sbr.rel (%p325) target = $region48
      $region47: #{gt_layer_forward.2} parent=35 // pred_region
        %s328 = sadd.s32 %s23, %s24
        %p329 = scmp.lt.s32.totalorder %s328, 1
        %s330 = scalar_select %p329, %s328, 1
        %s331 = scalar_lea.vmem %s2, %s330
        %s332 = sadd.s32 %s23, %s24
      $region48: #{gt_layer_forward.2} parent=35 // pred_fallthru
        _
    $region36: #{gt_layer_forward.2} parent=5 // pred_fallthru
      _
    %p333 = scmp.le.s32.totalorder 1, %s16
    %p334 = scmp.lt.s32.totalorder %s16, 3
    %p335 = pnand %p333, %p334
    %p336 = pneg %p335
    // Predicated region
    $region49: #{gt_layer_forward.2} parent=5 // pred_check
      _
    $region50: #{gt_layer_forward.2} parent=5 // pred_check_branch
      %338 = sbr.rel (%p335) target = $region52
    $region51: #{gt_layer_forward.2} parent=5 // pred_region
      %s339 = ssub.s32 %s16, 1
      %s340 = sadd.s32 %s25, %s26
      %s341 = smul.u32 16, %s340
      %p342 = scmp.lt.s32.totalorder %s341, 31
      %s343 = scalar_select %p342, %s341, 31
      %s344 = smul.addr %s343, 8
      %s345 = scalar_lea.vmem %s0, %s344
      %p346 = pneg %p56
      %p347 = pneg %p53
      %s348 = sadd.s32 %s25, %s26
      %s349 = smul.u32 16, %s348
      %p350 = scmp.lt.s32.totalorder %s349, 31
      %s351 = scalar_select %p350, %s349, 31
      %s352 = smul.addr %s351, 8
      %s353 = scalar_lea.vmem %s1, %s352
      %p354 = pneg %p84
      %p355 = pneg %p81
      %s356 = sadd.s32 %s25, %s26
      %p357 = scmp.lt.s32.totalorder %s356, 1
      %s358 = scalar_select %p357, %s356, 1
      %s359 = scalar_lea.vmem %s2, %s358
      %p360 = pneg %p112
      %p361 = pneg %p109
      %p362 = pneg %p133
      %p363 = pneg %p130
      %p364 = pneg %p154
      %p365 = pneg %p151
      %p366 = pneg %p175
      %p367 = pneg %p172
      %p368 = pneg %p196
      %p369 = pneg %p193
      %p370 = pneg %p217
      %p371 = pneg %p214
      %p372 = pneg %p243
      %p373 = pneg %p240
      %p374 = scmp.lt.s32.totalorder %s25, 1
      %s375 = scalar_select %p374, %s25, 1
      %s376 = smul.addr %s375, 2
      %s377 = smul.addr %s376, 8
      %s378 = scalar_lea.vmem %s8, %s377
      %p379 = pneg %p269
      %p380 = pneg %p266
      %p381 = scmp.lt.s32.totalorder %s25, 1
      %s382 = scalar_select %p381, %s25, 1
      %s383 = smul.addr %s382, 2
      %s384 = smul.addr %s383, 8
      %s385 = scalar_lea.vmem %s9, %s384
      %s386 = sadd.s32 %s25, %s26
      %s387 = smul.u32 16, %s386
      %p388 = scmp.lt.s32.totalorder %s387, 31
      %s389 = scalar_select %p388, %s387, 31
      %s390 = smul.addr %s389, 8
      %s391 = scalar_lea.vmem %s0, %s390
      %s392 = sadd.s32 %s25, %s26
      %s393 = smul.u32 16, %s392
      %s394 = sadd.s32 %s25, %s26
      %s395 = smul.u32 16, %s394
      %p396 = scmp.lt.s32.totalorder %s395, 31
      %s397 = scalar_select %p396, %s395, 31
      %s398 = smul.addr %s397, 8
      %s399 = scalar_lea.vmem %s1, %s398
      %s400 = sadd.s32 %s25, %s26
      %s401 = smul.u32 16, %s400
      %s402 = sadd.s32 %s25, %s26
      %p403 = scmp.lt.s32.totalorder %s402, 1
      %s404 = scalar_select %p403, %s402, 1
      %s405 = scalar_lea.vmem %s2, %s404
      %s406 = sadd.s32 %s25, %s26
      %p407 = scmp.lt.s32.totalorder %s25, 1
      %s408 = scalar_select %p407, %s25, 1
      %s409 = smul.addr %s408, 2
      %s410 = smul.addr %s409, 8
      %s411 = scalar_lea.vmem %s8, %s410
      %p412 = scmp.lt.s32.totalorder %s25, 1
      %s413 = scalar_select %p412, %s25, 1
      %s414 = smul.addr %s413, 2
      %s415 = smul.addr %s414, 8
      %s416 = scalar_lea.vmem %s9, %s415
      %p417 = scmp.eq.s32.totalorder %s26, 0
      // Predicated region
      $region53: #{gt_layer_forward.2} parent=51 // pred_check
        %p418 = pneg %p417
      $region54: #{gt_layer_forward.2} parent=51 // pred_check_branch
        %420 = sbr.rel (%p418) target = $region56
      $region55: #{gt_layer_forward.2} parent=51 // pred_region
        %vm421 = vcmask 31744
        %422 = vst.msk [vmem:[%s411] sm:$0xff] %vm421, 0.0
        %423 = vst.msk [vmem:[%s411 + $0x8] sm:$0xff] %vm421, 0.0
        %424 = vst [vmem:[%s416] sm:$0xff] 0.0
        %425 = vst [vmem:[%s416 + $0x8] sm:$0xff] 0.0
      $region56: #{gt_layer_forward.2} parent=51 // pred_fallthru
        _
      %v426 = vld [vmem:[%s391] sm:$0xff]
      %v427 = vld [vmem:[%s391 + $0x8] sm:$0xff]
      %v428 = vld [vmem:[%s391 + $0x10] sm:$0xff]
      %v429 = vld [vmem:[%s391 + $0x18] sm:$0xff]
      %v430 = vld [vmem:[%s391 + $0x20] sm:$0xff]
      %v431 = vld [vmem:[%s391 + $0x28] sm:$0xff]
      %v432 = vld [vmem:[%s391 + $0x30] sm:$0xff]
      %v433 = vld [vmem:[%s391 + $0x38] sm:$0xff]
      %v434 = vld [vmem:[%s391 + $0x40] sm:$0xff]
      %v435 = vld [vmem:[%s391 + $0x48] sm:$0xff]
      %v436 = vld [vmem:[%s391 + $0x50] sm:$0xff]
      %v437 = vld [vmem:[%s391 + $0x58] sm:$0xff]
      %v438 = vld [vmem:[%s391 + $0x60] sm:$0xff]
      %v439 = vld [vmem:[%s391 + $0x68] sm:$0xff]
      %v440 = vld [vmem:[%s391 + $0x70] sm:$0xff]
      %v441 = vld [vmem:[%s391 + $0x78] sm:$0xff]
      %v442 = vld [vmem:[%s399] sm:$0xff]
      %v443 = vld [vmem:[%s399 + $0x8] sm:$0xff]
      %v444 = vld [vmem:[%s399 + $0x10] sm:$0xff]
      %v445 = vld [vmem:[%s399 + $0x18] sm:$0xff]
      %v446 = vld [vmem:[%s399 + $0x20] sm:$0xff]
      %v447 = vld [vmem:[%s399 + $0x28] sm:$0xff]
      %v448 = vld [vmem:[%s399 + $0x30] sm:$0xff]
      %v449 = vld [vmem:[%s399 + $0x38] sm:$0xff]
      %v450 = vld [vmem:[%s399 + $0x40] sm:$0xff]
      %v451 = vld [vmem:[%s399 + $0x48] sm:$0xff]
      %v452 = vld [vmem:[%s399 + $0x50] sm:$0xff]
      %v453 = vld [vmem:[%s399 + $0x58] sm:$0xff]
      %v454 = vld [vmem:[%s399 + $0x60] sm:$0xff]
      %v455 = vld [vmem:[%s399 + $0x68] sm:$0xff]
      %v456 = vld [vmem:[%s399 + $0x70] sm:$0xff]
      %v457 = vld [vmem:[%s399 + $0x78] sm:$0xff]
      %v458 = vld [vmem:[%s405] sm:$0x1]
      %v459 = vlaneseq
      %v460 = vand.u32 %v459, 127
      %v461 = vlaneseq
      %v462 = vshrl.u32 %v461, 7
      %v463 = vadd.s32 %v462, 8
      %464 = vset.pattern.permute.xlu0 0
      %465 = vperm.xlu0 %464, %v426
      %v466 = vpop.permute.xlu0 %465
      %467 = vset.pattern.permute.xlu0 0
      %468 = vperm.xlu0 %467, %v427
      %v469 = vpop.permute.xlu0 %468
      %470 = vset.pattern.permute.xlu0 0
      %471 = vperm.xlu0 %470, %v428
      %v472 = vpop.permute.xlu0 %471
      %473 = vset.pattern.permute.xlu0 0
      %474 = vperm.xlu0 %473, %v429
      %v475 = vpop.permute.xlu0 %474
      %476 = vset.pattern.permute.xlu0 0
      %477 = vperm.xlu0 %476, %v430
      %v478 = vpop.permute.xlu0 %477
      %479 = vset.pattern.permute.xlu0 0
      %480 = vperm.xlu0 %479, %v431
      %v481 = vpop.permute.xlu0 %480
      %482 = vset.pattern.permute.xlu0 0
      %483 = vperm.xlu0 %482, %v432
      %v484 = vpop.permute.xlu0 %483
      %485 = vset.pattern.permute.xlu0 0
      %486 = vperm.xlu0 %485, %v433
      %v487 = vpop.permute.xlu0 %486
      %488 = vset.pattern.permute.xlu0 0
      %489 = vperm.xlu0 %488, %v434
      %v490 = vpop.permute.xlu0 %489
      %491 = vset.pattern.permute.xlu0 0
      %492 = vperm.xlu0 %491, %v435
      %v493 = vpop.permute.xlu0 %492
      %494 = vset.pattern.permute.xlu0 0
      %495 = vperm.xlu0 %494, %v436
      %v496 = vpop.permute.xlu0 %495
      %497 = vset.pattern.permute.xlu0 0
      %498 = vperm.xlu0 %497, %v437
      %v499 = vpop.permute.xlu0 %498
      %500 = vset.pattern.permute.xlu0 0
      %501 = vperm.xlu0 %500, %v438
      %v502 = vpop.permute.xlu0 %501
      %503 = vset.pattern.permute.xlu0 0
      %504 = vperm.xlu0 %503, %v439
      %v505 = vpop.permute.xlu0 %504
      %506 = vset.pattern.permute.xlu0 0
      %507 = vperm.xlu0 %506, %v440
      %v508 = vpop.permute.xlu0 %507
      %509 = vset.pattern.permute.xlu0 0
      %510 = vperm.xlu0 %509, %v441
      %v511 = vpop.permute.xlu0 %510
      %vm512 = vcmp.eq.s32.totalorder %v466, %v460
      %vm513 = vcmp.eq.s32.totalorder %v469, %v460
      %vm514 = vcmp.eq.s32.totalorder %v472, %v460
      %vm515 = vcmp.eq.s32.totalorder %v475, %v460
      %vm516 = vcmp.eq.s32.totalorder %v478, %v460
      %vm517 = vcmp.eq.s32.totalorder %v481, %v460
      %vm518 = vcmp.eq.s32.totalorder %v484, %v460
      %vm519 = vcmp.eq.s32.totalorder %v487, %v460
      %vm520 = vcmp.eq.s32.totalorder %v490, %v460
      %vm521 = vcmp.eq.s32.totalorder %v493, %v460
      %vm522 = vcmp.eq.s32.totalorder %v496, %v460
      %vm523 = vcmp.eq.s32.totalorder %v499, %v460
      %vm524 = vcmp.eq.s32.totalorder %v502, %v460
      %vm525 = vcmp.eq.s32.totalorder %v505, %v460
      %vm526 = vcmp.eq.s32.totalorder %v508, %v460
      %vm527 = vcmp.eq.s32.totalorder %v511, %v460
      %v528 = vsel %vm512, 1, 0
      %v529 = vsel %vm513, 1, 0
      %v530 = vsel %vm514, 1, 0
      %v531 = vsel %vm515, 1, 0
      %v532 = vsel %vm516, 1, 0
      %v533 = vsel %vm517, 1, 0
      %v534 = vsel %vm518, 1, 0
      %v535 = vsel %vm519, 1, 0
      %v536 = vsel %vm520, 1, 0
      %v537 = vsel %vm521, 1, 0
      %v538 = vsel %vm522, 1, 0
      %v539 = vsel %vm523, 1, 0
      %v540 = vsel %vm524, 1, 0
      %v541 = vsel %vm525, 1, 0
      %v542 = vsel %vm526, 1, 0
      %v543 = vsel %vm527, 1, 0
      %v544 = vcvt.s32.f32 %v528
      %v545 = vcvt.s32.f32 %v529
      %v546 = vcvt.s32.f32 %v530
      %v547 = vcvt.s32.f32 %v531
      %v548 = vcvt.s32.f32 %v532
      %v549 = vcvt.s32.f32 %v533
      %v550 = vcvt.s32.f32 %v534
      %v551 = vcvt.s32.f32 %v535
      %v552 = vcvt.s32.f32 %v536
      %v553 = vcvt.s32.f32 %v537
      %v554 = vcvt.s32.f32 %v538
      %v555 = vcvt.s32.f32 %v539
      %v556 = vcvt.s32.f32 %v540
      %v557 = vcvt.s32.f32 %v541
      %v558 = vcvt.s32.f32 %v542
      %v559 = vcvt.s32.f32 %v543
      %560 = vset.pattern.permute.xlu0 0
      %561 = vperm.xlu0 %560, %v442
      %v562 = vpop.permute.xlu0 %561
      %563 = vset.pattern.permute.xlu0 0
      %564 = vperm.xlu0 %563, %v443
      %v565 = vpop.permute.xlu0 %564
      %566 = vset.pattern.permute.xlu0 0
      %567 = vperm.xlu0 %566, %v444
      %v568 = vpop.permute.xlu0 %567
      %569 = vset.pattern.permute.xlu0 0
      %570 = vperm.xlu0 %569, %v445
      %v571 = vpop.permute.xlu0 %570
      %572 = vset.pattern.permute.xlu0 0
      %573 = vperm.xlu0 %572, %v446
      %v574 = vpop.permute.xlu0 %573
      %575 = vset.pattern.permute.xlu0 0
      %576 = vperm.xlu0 %575, %v447
      %v577 = vpop.permute.xlu0 %576
      %578 = vset.pattern.permute.xlu0 0
      %579 = vperm.xlu0 %578, %v448
      %v580 = vpop.permute.xlu0 %579
      %581 = vset.pattern.permute.xlu0 0
      %582 = vperm.xlu0 %581, %v449
      %v583 = vpop.permute.xlu0 %582
      %584 = vset.pattern.permute.xlu0 0
      %585 = vperm.xlu0 %584, %v450
      %v586 = vpop.permute.xlu0 %585
      %587 = vset.pattern.permute.xlu0 0
      %588 = vperm.xlu0 %587, %v451
      %v589 = vpop.permute.xlu0 %588
      %590 = vset.pattern.permute.xlu0 0
      %591 = vperm.xlu0 %590, %v452
      %v592 = vpop.permute.xlu0 %591
      %593 = vset.pattern.permute.xlu0 0
      %594 = vperm.xlu0 %593, %v453
      %v595 = vpop.permute.xlu0 %594
      %596 = vset.pattern.permute.xlu0 0
      %597 = vperm.xlu0 %596, %v454
      %v598 = vpop.permute.xlu0 %597
      %599 = vset.pattern.permute.xlu0 0
      %600 = vperm.xlu0 %599, %v455
      %v601 = vpop.permute.xlu0 %600
      %602 = vset.pattern.permute.xlu0 0
      %603 = vperm.xlu0 %602, %v456
      %v604 = vpop.permute.xlu0 %603
      %605 = vset.pattern.permute.xlu0 0
      %606 = vperm.xlu0 %605, %v457
      %v607 = vpop.permute.xlu0 %606
      %vm608 = vcmp.eq.s32.totalorder %v562, %v460
      %vm609 = vcmp.eq.s32.totalorder %v565, %v460
      %vm610 = vcmp.eq.s32.totalorder %v568, %v460
      %vm611 = vcmp.eq.s32.totalorder %v571, %v460
      %vm612 = vcmp.eq.s32.totalorder %v574, %v460
      %vm613 = vcmp.eq.s32.totalorder %v577, %v460
      %vm614 = vcmp.eq.s32.totalorder %v580, %v460
      %vm615 = vcmp.eq.s32.totalorder %v583, %v460
      %vm616 = vcmp.eq.s32.totalorder %v586, %v460
      %vm617 = vcmp.eq.s32.totalorder %v589, %v460
      %vm618 = vcmp.eq.s32.totalorder %v592, %v460
      %vm619 = vcmp.eq.s32.totalorder %v595, %v460
      %vm620 = vcmp.eq.s32.totalorder %v598, %v460
      %vm621 = vcmp.eq.s32.totalorder %v601, %v460
      %vm622 = vcmp.eq.s32.totalorder %v604, %v460
      %vm623 = vcmp.eq.s32.totalorder %v607, %v460
      %v624 = vsel %vm608, 1, 0
      %v625 = vsel %vm609, 1, 0
      %v626 = vsel %vm610, 1, 0
      %v627 = vsel %vm611, 1, 0
      %v628 = vsel %vm612, 1, 0
      %v629 = vsel %vm613, 1, 0
      %v630 = vsel %vm614, 1, 0
      %v631 = vsel %vm615, 1, 0
      %v632 = vsel %vm616, 1, 0
      %v633 = vsel %vm617, 1, 0
      %v634 = vsel %vm618, 1, 0
      %v635 = vsel %vm619, 1, 0
      %v636 = vsel %vm620, 1, 0
      %v637 = vsel %vm621, 1, 0
      %v638 = vsel %vm622, 1, 0
      %v639 = vsel %vm623, 1, 0
      %v640 = vcvt.s32.f32 %v624
      %v641 = vcvt.s32.f32 %v625
      %v642 = vcvt.s32.f32 %v626
      %v643 = vcvt.s32.f32 %v627
      %v644 = vcvt.s32.f32 %v628
      %v645 = vcvt.s32.f32 %v629
      %v646 = vcvt.s32.f32 %v630
      %v647 = vcvt.s32.f32 %v631
      %v648 = vcvt.s32.f32 %v632
      %v649 = vcvt.s32.f32 %v633
      %v650 = vcvt.s32.f32 %v634
      %v651 = vcvt.s32.f32 %v635
      %v652 = vcvt.s32.f32 %v636
      %v653 = vcvt.s32.f32 %v637
      %v654 = vcvt.s32.f32 %v638
      %v655 = vcvt.s32.f32 %v639
      %v656 = vlaneseq
      %v657 = vshrl.u32 %v656, 7
      %v658 = vsub.s32 0, %v657
      %v659 = vrot.slane %v458, %v658
      %vm660 = vcmp.eq.s32.totalorder %v659, %v462
      %vm661 = vcmp.eq.s32.totalorder %v659, %v463
      %v662 = vsel %vm660, 1, 0
      %v663 = vsel %vm661, 1, 0
      %v664 = vcvt.s32.f32 %v662
      %v665 = vcvt.s32.f32 %v663
      %v666 = vld [vmem:[%s3] sm:$0xff]
      %v667 = vld [vmem:[%s3 + $0x8] sm:$0xff]
      %vm668 = vcmask 130048
      %v670 = vsel %vm668, %v544, 0
      %v673 = vsel %vm668, %v545, 0
      %v676 = vsel %vm668, %v546, 0
      %v679 = vsel %vm668, %v547, 0
      %v682 = vsel %vm668, %v548, 0
      %v685 = vsel %vm668, %v549, 0
      %v688 = vsel %vm668, %v550, 0
      %v691 = vsel %vm668, %v551, 0
      %v694 = vsel %vm668, %v552, 0
      %v697 = vsel %vm668, %v553, 0
      %v700 = vsel %vm668, %v554, 0
      %v703 = vsel %vm668, %v555, 0
      %v706 = vsel %vm668, %v556, 0
      %v709 = vsel %vm668, %v557, 0
      %v712 = vsel %vm668, %v558, 0
      %v715 = vsel %vm668, %v559, 0
      %717 = vmatprep.subr.mxu0 0.0
      %718 = vmatpush1.msra.mxu0 0.0
      %719 = vmatprep.subr.mxu0 0.0
      %720 = vmatpush1.msra.mxu0 0.0
      %721 = vmatprep.subr.mxu0 0.0
      %722 = vmatpush1.msra.mxu0 0.0
      %723 = vmatprep.subr.mxu0 0.0
      %724 = vmatpush1.msra.mxu0 0.0
      %725 = vmatprep.subr.mxu0 0.0
      %726 = vmatpush1.msra.mxu0 0.0
      %727 = vmatprep.subr.mxu0 0.0
      %728 = vmatpush1.msra.mxu0 0.0
      %729 = vmatprep.subr.mxu0 0.0
      %730 = vmatpush1.msra.mxu0 0.0
      %731 = vmatprep.subr.mxu0 0.0
      %732 = vmatpush1.msra.mxu0 0.0
      %733 = vmatprep.subr.mxu0 0.0
      %734 = vmatpush1.msra.mxu0 0.0
      %735 = vmatprep.subr.mxu0 0.0
      %736 = vmatpush1.msra.mxu0 0.0
      %737 = vmatprep.subr.mxu0 0.0
      %738 = vmatpush1.msra.mxu0 0.0
      %739 = vmatprep.subr.mxu0 0.0
      %740 = vmatpush1.msra.mxu0 0.0
      %741 = vmatprep.subr.mxu0 0.0
      %742 = vmatpush1.msra.mxu0 0.0
      %743 = vmatprep.subr.mxu0 0.0
      %744 = vmatpush1.msra.mxu0 0.0
      %745 = vmatprep.subr.mxu0 0.0
      %746 = vmatpush1.msra.mxu0 %v667
      %747 = vmatprep.subr.mxu0 0.0
      %748 = vmatpush1.msra.mxu0 %v666
      %749 = vmatprep.subr.mxu0 0.0
      %750 = vmatpush2.msra.mxu0 0.0
      %751 = vmatprep.subr.mxu0 0.0
      %752 = vmatpush2.msra.mxu0 0.0
      %753 = vmatprep.subr.mxu0 0.0
      %754 = vmatpush2.msra.mxu0 0.0
      %755 = vmatprep.subr.mxu0 0.0
      %756 = vmatpush2.msra.mxu0 0.0
      %757 = vmatprep.subr.mxu0 0.0
      %758 = vmatpush2.msra.mxu0 0.0
      %759 = vmatprep.subr.mxu0 0.0
      %760 = vmatpush2.msra.mxu0 0.0
      %761 = vmatprep.subr.mxu0 0.0
      %762 = vmatpush2.msra.mxu0 0.0
      %763 = vmatprep.subr.mxu0 0.0
      %764 = vmatpush2.msra.mxu0 0.0
      %765 = vmatprep.subr.mxu0 0.0
      %766 = vmatpush2.msra.mxu0 0.0
      %767 = vmatprep.subr.mxu0 0.0
      %768 = vmatpush2.msra.mxu0 0.0
      %769 = vmatprep.subr.mxu0 0.0
      %770 = vmatpush2.msra.mxu0 0.0
      %771 = vmatprep.subr.mxu0 0.0
      %772 = vmatpush2.msra.mxu0 0.0
      %773 = vmatprep.subr.mxu0 0.0
      %774 = vmatpush2.msra.mxu0 0.0
      %775 = vmatprep.subr.mxu0 0.0
      %776 = vmatpush2.msra.mxu0 0.0
      %777 = vmatprep.subr.mxu0 0.0
      %778 = vmatpush2.msra.mxu0 0.0
      %779 = vmatprep.subr.mxu0 0.0
      %780 = vmatpush2.msra.mxu0 0.0
      %781 = vmatprep.mubr.f32.mxu0 0.0
      %782 = vmatmul.mubr.f32.gmra.mxu0 %v670
      %v783 = vpop.f32.mrf.mxu0
      %v784 = vadd.f32 0.0, %v783
      %v785 = vpop.f32.mrf.mxu0
      %786 = vmatprep.mubr.f32.mxu0 0.0
      %787 = vmatmul.mubr.f32.gmra.mxu0 %v673
      %v788 = vpop.f32.mrf.mxu0
      %v789 = vadd.f32 0.0, %v788
      %v790 = vpop.f32.mrf.mxu0
      %791 = vmatprep.mubr.f32.mxu0 0.0
      %792 = vmatmul.mubr.f32.gmra.mxu0 %v676
      %v793 = vpop.f32.mrf.mxu0
      %v794 = vadd.f32 0.0, %v793
      %v795 = vpop.f32.mrf.mxu0
      %796 = vmatprep.mubr.f32.mxu0 0.0
      %797 = vmatmul.mubr.f32.gmra.mxu0 %v679
      %v798 = vpop.f32.mrf.mxu0
      %v799 = vadd.f32 0.0, %v798
      %v800 = vpop.f32.mrf.mxu0
      %801 = vmatprep.mubr.f32.mxu0 0.0
      %802 = vmatmul.mubr.f32.gmra.mxu0 %v682
      %v803 = vpop.f32.mrf.mxu0
      %v804 = vadd.f32 0.0, %v803
      %v805 = vpop.f32.mrf.mxu0
      %806 = vmatprep.mubr.f32.mxu0 0.0
      %807 = vmatmul.mubr.f32.gmra.mxu0 %v685
      %v808 = vpop.f32.mrf.mxu0
      %v809 = vadd.f32 0.0, %v808
      %v810 = vpop.f32.mrf.mxu0
      %811 = vmatprep.mubr.f32.mxu0 0.0
      %812 = vmatmul.mubr.f32.gmra.mxu0 %v688
      %v813 = vpop.f32.mrf.mxu0
      %v814 = vadd.f32 0.0, %v813
      %v815 = vpop.f32.mrf.mxu0
      %816 = vmatprep.mubr.f32.mxu0 0.0
      %817 = vmatmul.mubr.f32.gmra.mxu0 %v691
      %v818 = vpop.f32.mrf.mxu0
      %v819 = vadd.f32 0.0, %v818
      %v820 = vpop.f32.mrf.mxu0
      %821 = vmatprep.mubr.f32.mxu0 0.0
      %822 = vmatmul.mubr.f32.gmra.mxu0 %v694
      %v823 = vpop.f32.mrf.mxu0
      %v824 = vadd.f32 0.0, %v823
      %v825 = vpop.f32.mrf.mxu0
      %826 = vmatprep.mubr.f32.mxu0 0.0
      %827 = vmatmul.mubr.f32.gmra.mxu0 %v697
      %v828 = vpop.f32.mrf.mxu0
      %v829 = vadd.f32 0.0, %v828
      %v830 = vpop.f32.mrf.mxu0
      %831 = vmatprep.mubr.f32.mxu0 0.0
      %832 = vmatmul.mubr.f32.gmra.mxu0 %v700
      %v833 = vpop.f32.mrf.mxu0
      %v834 = vadd.f32 0.0, %v833
      %v835 = vpop.f32.mrf.mxu0
      %836 = vmatprep.mubr.f32.mxu0 0.0
      %837 = vmatmul.mubr.f32.gmra.mxu0 %v703
      %v838 = vpop.f32.mrf.mxu0
      %v839 = vadd.f32 0.0, %v838
      %v840 = vpop.f32.mrf.mxu0
      %841 = vmatprep.mubr.f32.mxu0 0.0
      %842 = vmatmul.mubr.f32.gmra.mxu0 %v706
      %v843 = vpop.f32.mrf.mxu0
      %v844 = vadd.f32 0.0, %v843
      %v845 = vpop.f32.mrf.mxu0
      %846 = vmatprep.mubr.f32.mxu0 0.0
      %847 = vmatmul.mubr.f32.gmra.mxu0 %v709
      %v848 = vpop.f32.mrf.mxu0
      %v849 = vadd.f32 0.0, %v848
      %v850 = vpop.f32.mrf.mxu0
      %851 = vmatprep.mubr.f32.mxu0 0.0
      %852 = vmatmul.mubr.f32.gmra.mxu0 %v712
      %v853 = vpop.f32.mrf.mxu0
      %v854 = vadd.f32 0.0, %v853
      %v855 = vpop.f32.mrf.mxu0
      %856 = vmatprep.mubr.f32.mxu0 0.0
      %857 = vmatmul.mubr.f32.gmra.mxu0 %v715
      %v858 = vpop.f32.mrf.mxu0
      %v859 = vadd.f32 0.0, %v858
      %v860 = vpop.f32.mrf.mxu0
      %861 = vdwg.mxu0
      %v862 = vld [vmem:[%s4] sm:$0xff]
      %v863 = vld [vmem:[%s4 + $0x8] sm:$0xff]
      %v865 = vsel %vm668, %v640, 0
      %v868 = vsel %vm668, %v641, 0
      %v871 = vsel %vm668, %v642, 0
      %v874 = vsel %vm668, %v643, 0
      %v877 = vsel %vm668, %v644, 0
      %v880 = vsel %vm668, %v645, 0
      %v883 = vsel %vm668, %v646, 0
      %v886 = vsel %vm668, %v647, 0
      %v889 = vsel %vm668, %v648, 0
      %v892 = vsel %vm668, %v649, 0
      %v895 = vsel %vm668, %v650, 0
      %v898 = vsel %vm668, %v651, 0
      %v901 = vsel %vm668, %v652, 0
      %v904 = vsel %vm668, %v653, 0
      %v907 = vsel %vm668, %v654, 0
      %v910 = vsel %vm668, %v655, 0
      %912 = vmatprep.subr.mxu0 0.0
      %913 = vmatpush1.msra.mxu0 0.0
      %914 = vmatprep.subr.mxu0 0.0
      %915 = vmatpush1.msra.mxu0 0.0
      %916 = vmatprep.subr.mxu0 0.0
      %917 = vmatpush1.msra.mxu0 0.0
      %918 = vmatprep.subr.mxu0 0.0
      %919 = vmatpush1.msra.mxu0 0.0
      %920 = vmatprep.subr.mxu0 0.0
      %921 = vmatpush1.msra.mxu0 0.0
      %922 = vmatprep.subr.mxu0 0.0
      %923 = vmatpush1.msra.mxu0 0.0
      %924 = vmatprep.subr.mxu0 0.0
      %925 = vmatpush1.msra.mxu0 0.0
      %926 = vmatprep.subr.mxu0 0.0
      %927 = vmatpush1.msra.mxu0 0.0
      %928 = vmatprep.subr.mxu0 0.0
      %929 = vmatpush1.msra.mxu0 0.0
      %930 = vmatprep.subr.mxu0 0.0
      %931 = vmatpush1.msra.mxu0 0.0
      %932 = vmatprep.subr.mxu0 0.0
      %933 = vmatpush1.msra.mxu0 0.0
      %934 = vmatprep.subr.mxu0 0.0
      %935 = vmatpush1.msra.mxu0 0.0
      %936 = vmatprep.subr.mxu0 0.0
      %937 = vmatpush1.msra.mxu0 0.0
      %938 = vmatprep.subr.mxu0 0.0
      %939 = vmatpush1.msra.mxu0 0.0
      %940 = vmatprep.subr.mxu0 0.0
      %941 = vmatpush1.msra.mxu0 %v863
      %942 = vmatprep.subr.mxu0 0.0
      %943 = vmatpush1.msra.mxu0 %v862
      %944 = vmatprep.subr.mxu0 0.0
      %945 = vmatpush2.msra.mxu0 0.0
      %946 = vmatprep.subr.mxu0 0.0
      %947 = vmatpush2.msra.mxu0 0.0
      %948 = vmatprep.subr.mxu0 0.0
      %949 = vmatpush2.msra.mxu0 0.0
      %950 = vmatprep.subr.mxu0 0.0
      %951 = vmatpush2.msra.mxu0 0.0
      %952 = vmatprep.subr.mxu0 0.0
      %953 = vmatpush2.msra.mxu0 0.0
      %954 = vmatprep.subr.mxu0 0.0
      %955 = vmatpush2.msra.mxu0 0.0
      %956 = vmatprep.subr.mxu0 0.0
      %957 = vmatpush2.msra.mxu0 0.0
      %958 = vmatprep.subr.mxu0 0.0
      %959 = vmatpush2.msra.mxu0 0.0
      %960 = vmatprep.subr.mxu0 0.0
      %961 = vmatpush2.msra.mxu0 0.0
      %962 = vmatprep.subr.mxu0 0.0
      %963 = vmatpush2.msra.mxu0 0.0
      %964 = vmatprep.subr.mxu0 0.0
      %965 = vmatpush2.msra.mxu0 0.0
      %966 = vmatprep.subr.mxu0 0.0
      %967 = vmatpush2.msra.mxu0 0.0
      %968 = vmatprep.subr.mxu0 0.0
      %969 = vmatpush2.msra.mxu0 0.0
      %970 = vmatprep.subr.mxu0 0.0
      %971 = vmatpush2.msra.mxu0 0.0
      %972 = vmatprep.subr.mxu0 0.0
      %973 = vmatpush2.msra.mxu0 0.0
      %974 = vmatprep.subr.mxu0 0.0
      %975 = vmatpush2.msra.mxu0 0.0
      %976 = vmatprep.mubr.f32.mxu0 0.0
      %977 = vmatmul.mubr.f32.gmra.mxu0 %v865
      %v978 = vpop.f32.mrf.mxu0
      %v979 = vadd.f32 0.0, %v978
      %v980 = vpop.f32.mrf.mxu0
      %981 = vmatprep.mubr.f32.mxu0 0.0
      %982 = vmatmul.mubr.f32.gmra.mxu0 %v868
      %v983 = vpop.f32.mrf.mxu0
      %v984 = vadd.f32 0.0, %v983
      %v985 = vpop.f32.mrf.mxu0
      %986 = vmatprep.mubr.f32.mxu0 0.0
      %987 = vmatmul.mubr.f32.gmra.mxu0 %v871
      %v988 = vpop.f32.mrf.mxu0
      %v989 = vadd.f32 0.0, %v988
      %v990 = vpop.f32.mrf.mxu0
      %991 = vmatprep.mubr.f32.mxu0 0.0
      %992 = vmatmul.mubr.f32.gmra.mxu0 %v874
      %v993 = vpop.f32.mrf.mxu0
      %v994 = vadd.f32 0.0, %v993
      %v995 = vpop.f32.mrf.mxu0
      %996 = vmatprep.mubr.f32.mxu0 0.0
      %997 = vmatmul.mubr.f32.gmra.mxu0 %v877
      %v998 = vpop.f32.mrf.mxu0
      %v999 = vadd.f32 0.0, %v998
      %v1000 = vpop.f32.mrf.mxu0
      %1001 = vmatprep.mubr.f32.mxu0 0.0
      %1002 = vmatmul.mubr.f32.gmra.mxu0 %v880
      %v1003 = vpop.f32.mrf.mxu0
      %v1004 = vadd.f32 0.0, %v1003
      %v1005 = vpop.f32.mrf.mxu0
      %1006 = vmatprep.mubr.f32.mxu0 0.0
      %1007 = vmatmul.mubr.f32.gmra.mxu0 %v883
      %v1008 = vpop.f32.mrf.mxu0
      %v1009 = vadd.f32 0.0, %v1008
      %v1010 = vpop.f32.mrf.mxu0
      %1011 = vmatprep.mubr.f32.mxu0 0.0
      %1012 = vmatmul.mubr.f32.gmra.mxu0 %v886
      %v1013 = vpop.f32.mrf.mxu0
      %v1014 = vadd.f32 0.0, %v1013
      %v1015 = vpop.f32.mrf.mxu0
      %1016 = vmatprep.mubr.f32.mxu0 0.0
      %1017 = vmatmul.mubr.f32.gmra.mxu0 %v889
      %v1018 = vpop.f32.mrf.mxu0
      %v1019 = vadd.f32 0.0, %v1018
      %v1020 = vpop.f32.mrf.mxu0
      %1021 = vmatprep.mubr.f32.mxu0 0.0
      %1022 = vmatmul.mubr.f32.gmra.mxu0 %v892
      %v1023 = vpop.f32.mrf.mxu0
      %v1024 = vadd.f32 0.0, %v1023
      %v1025 = vpop.f32.mrf.mxu0
      %1026 = vmatprep.mubr.f32.mxu0 0.0
      %1027 = vmatmul.mubr.f32.gmra.mxu0 %v895
      %v1028 = vpop.f32.mrf.mxu0
      %v1029 = vadd.f32 0.0, %v1028
      %v1030 = vpop.f32.mrf.mxu0
      %1031 = vmatprep.mubr.f32.mxu0 0.0
      %1032 = vmatmul.mubr.f32.gmra.mxu0 %v898
      %v1033 = vpop.f32.mrf.mxu0
      %v1034 = vadd.f32 0.0, %v1033
      %v1035 = vpop.f32.mrf.mxu0
      %1036 = vmatprep.mubr.f32.mxu0 0.0
      %1037 = vmatmul.mubr.f32.gmra.mxu0 %v901
      %v1038 = vpop.f32.mrf.mxu0
      %v1039 = vadd.f32 0.0, %v1038
      %v1040 = vpop.f32.mrf.mxu0
      %1041 = vmatprep.mubr.f32.mxu0 0.0
      %1042 = vmatmul.mubr.f32.gmra.mxu0 %v904
      %v1043 = vpop.f32.mrf.mxu0
      %v1044 = vadd.f32 0.0, %v1043
      %v1045 = vpop.f32.mrf.mxu0
      %1046 = vmatprep.mubr.f32.mxu0 0.0
      %1047 = vmatmul.mubr.f32.gmra.mxu0 %v907
      %v1048 = vpop.f32.mrf.mxu0
      %v1049 = vadd.f32 0.0, %v1048
      %v1050 = vpop.f32.mrf.mxu0
      %1051 = vmatprep.mubr.f32.mxu0 0.0
      %1052 = vmatmul.mubr.f32.gmra.mxu0 %v910
      %v1053 = vpop.f32.mrf.mxu0
      %v1054 = vadd.f32 0.0, %v1053
      %v1055 = vpop.f32.mrf.mxu0
      %1056 = vdwg.mxu0
      %v1057 = vld [vmem:[%s5] sm:$0xff]
      %v1058 = vld [vmem:[%s5 + $0x8] sm:$0xff]
      %1059 = vmatprep.subr.mxu0 0.0
      %1060 = vmatpush1.msra.mxu0 0.0
      %1061 = vmatprep.subr.mxu0 0.0
      %1062 = vmatpush1.msra.mxu0 0.0
      %1063 = vmatprep.subr.mxu0 0.0
      %1064 = vmatpush1.msra.mxu0 0.0
      %1065 = vmatprep.subr.mxu0 0.0
      %1066 = vmatpush1.msra.mxu0 0.0
      %1067 = vmatprep.subr.mxu0 0.0
      %1068 = vmatpush1.msra.mxu0 0.0
      %1069 = vmatprep.subr.mxu0 0.0
      %1070 = vmatpush1.msra.mxu0 0.0
      %1071 = vmatprep.subr.mxu0 0.0
      %1072 = vmatpush1.msra.mxu0 0.0
      %1073 = vmatprep.subr.mxu0 0.0
      %1074 = vmatpush1.msra.mxu0 0.0
      %1075 = vmatprep.subr.mxu0 0.0
      %1076 = vmatpush1.msra.mxu0 0.0
      %1077 = vmatprep.subr.mxu0 0.0
      %1078 = vmatpush1.msra.mxu0 0.0
      %1079 = vmatprep.subr.mxu0 0.0
      %1080 = vmatpush1.msra.mxu0 0.0
      %1081 = vmatprep.subr.mxu0 0.0
      %1082 = vmatpush1.msra.mxu0 0.0
      %1083 = vmatprep.subr.mxu0 0.0
      %1084 = vmatpush1.msra.mxu0 0.0
      %1085 = vmatprep.subr.mxu0 0.0
      %1086 = vmatpush1.msra.mxu0 0.0
      %1087 = vmatprep.subr.mxu0 0.0
      %1088 = vmatpush1.msra.mxu0 %v1058
      %1089 = vmatprep.subr.mxu0 0.0
      %1090 = vmatpush1.msra.mxu0 %v1057
      %1091 = vmatprep.subr.mxu0 0.0
      %1092 = vmatpush2.msra.mxu0 0.0
      %1093 = vmatprep.subr.mxu0 0.0
      %1094 = vmatpush2.msra.mxu0 0.0
      %1095 = vmatprep.subr.mxu0 0.0
      %1096 = vmatpush2.msra.mxu0 0.0
      %1097 = vmatprep.subr.mxu0 0.0
      %1098 = vmatpush2.msra.mxu0 0.0
      %1099 = vmatprep.subr.mxu0 0.0
      %1100 = vmatpush2.msra.mxu0 0.0
      %1101 = vmatprep.subr.mxu0 0.0
      %1102 = vmatpush2.msra.mxu0 0.0
      %1103 = vmatprep.subr.mxu0 0.0
      %1104 = vmatpush2.msra.mxu0 0.0
      %1105 = vmatprep.subr.mxu0 0.0
      %1106 = vmatpush2.msra.mxu0 0.0
      %1107 = vmatprep.subr.mxu0 0.0
      %1108 = vmatpush2.msra.mxu0 0.0
      %1109 = vmatprep.subr.mxu0 0.0
      %1110 = vmatpush2.msra.mxu0 0.0
      %1111 = vmatprep.subr.mxu0 0.0
      %1112 = vmatpush2.msra.mxu0 0.0
      %1113 = vmatprep.subr.mxu0 0.0
      %1114 = vmatpush2.msra.mxu0 0.0
      %1115 = vmatprep.subr.mxu0 0.0
      %1116 = vmatpush2.msra.mxu0 0.0
      %1117 = vmatprep.subr.mxu0 0.0
      %1118 = vmatpush2.msra.mxu0 0.0
      %1119 = vmatprep.subr.mxu0 0.0
      %1120 = vmatpush2.msra.mxu0 0.0
      %1121 = vmatprep.subr.mxu0 0.0
      %1122 = vmatpush2.msra.mxu0 0.0
      %1123 = vmatprep.mubr.f32.mxu0 0.0
      %1124 = vmatmul.mubr.f32.gmra.mxu0 %v865
      %v1125 = vpop.f32.mrf.mxu0
      %v1126 = vadd.f32 0.0, %v1125
      %v1127 = vpop.f32.mrf.mxu0
      %1128 = vmatprep.mubr.f32.mxu0 0.0
      %1129 = vmatmul.mubr.f32.gmra.mxu0 %v868
      %v1130 = vpop.f32.mrf.mxu0
      %v1131 = vadd.f32 0.0, %v1130
      %v1132 = vpop.f32.mrf.mxu0
      %1133 = vmatprep.mubr.f32.mxu0 0.0
      %1134 = vmatmul.mubr.f32.gmra.mxu0 %v871
      %v1135 = vpop.f32.mrf.mxu0
      %v1136 = vadd.f32 0.0, %v1135
      %v1137 = vpop.f32.mrf.mxu0
      %1138 = vmatprep.mubr.f32.mxu0 0.0
      %1139 = vmatmul.mubr.f32.gmra.mxu0 %v874
      %v1140 = vpop.f32.mrf.mxu0
      %v1141 = vadd.f32 0.0, %v1140
      %v1142 = vpop.f32.mrf.mxu0
      %1143 = vmatprep.mubr.f32.mxu0 0.0
      %1144 = vmatmul.mubr.f32.gmra.mxu0 %v877
      %v1145 = vpop.f32.mrf.mxu0
      %v1146 = vadd.f32 0.0, %v1145
      %v1147 = vpop.f32.mrf.mxu0
      %1148 = vmatprep.mubr.f32.mxu0 0.0
      %1149 = vmatmul.mubr.f32.gmra.mxu0 %v880
      %v1150 = vpop.f32.mrf.mxu0
      %v1151 = vadd.f32 0.0, %v1150
      %v1152 = vpop.f32.mrf.mxu0
      %1153 = vmatprep.mubr.f32.mxu0 0.0
      %1154 = vmatmul.mubr.f32.gmra.mxu0 %v883
      %v1155 = vpop.f32.mrf.mxu0
      %v1156 = vadd.f32 0.0, %v1155
      %v1157 = vpop.f32.mrf.mxu0
      %1158 = vmatprep.mubr.f32.mxu0 0.0
      %1159 = vmatmul.mubr.f32.gmra.mxu0 %v886
      %v1160 = vpop.f32.mrf.mxu0
      %v1161 = vadd.f32 0.0, %v1160
      %v1162 = vpop.f32.mrf.mxu0
      %1163 = vmatprep.mubr.f32.mxu0 0.0
      %1164 = vmatmul.mubr.f32.gmra.mxu0 %v889
      %v1165 = vpop.f32.mrf.mxu0
      %v1166 = vadd.f32 0.0, %v1165
      %v1167 = vpop.f32.mrf.mxu0
      %1168 = vmatprep.mubr.f32.mxu0 0.0
      %1169 = vmatmul.mubr.f32.gmra.mxu0 %v892
      %v1170 = vpop.f32.mrf.mxu0
      %v1171 = vadd.f32 0.0, %v1170
      %v1172 = vpop.f32.mrf.mxu0
      %1173 = vmatprep.mubr.f32.mxu0 0.0
      %1174 = vmatmul.mubr.f32.gmra.mxu0 %v895
      %v1175 = vpop.f32.mrf.mxu0
      %v1176 = vadd.f32 0.0, %v1175
      %v1177 = vpop.f32.mrf.mxu0
      %1178 = vmatprep.mubr.f32.mxu0 0.0
      %1179 = vmatmul.mubr.f32.gmra.mxu0 %v898
      %v1180 = vpop.f32.mrf.mxu0
      %v1181 = vadd.f32 0.0, %v1180
      %v1182 = vpop.f32.mrf.mxu0
      %1183 = vmatprep.mubr.f32.mxu0 0.0
      %1184 = vmatmul.mubr.f32.gmra.mxu0 %v901
      %v1185 = vpop.f32.mrf.mxu0
      %v1186 = vadd.f32 0.0, %v1185
      %v1187 = vpop.f32.mrf.mxu0
      %1188 = vmatprep.mubr.f32.mxu0 0.0
      %1189 = vmatmul.mubr.f32.gmra.mxu0 %v904
      %v1190 = vpop.f32.mrf.mxu0
      %v1191 = vadd.f32 0.0, %v1190
      %v1192 = vpop.f32.mrf.mxu0
      %1193 = vmatprep.mubr.f32.mxu0 0.0
      %1194 = vmatmul.mubr.f32.gmra.mxu0 %v907
      %v1195 = vpop.f32.mrf.mxu0
      %v1196 = vadd.f32 0.0, %v1195
      %v1197 = vpop.f32.mrf.mxu0
      %1198 = vmatprep.mubr.f32.mxu0 0.0
      %1199 = vmatmul.mubr.f32.gmra.mxu0 %v910
      %v1200 = vpop.f32.mrf.mxu0
      %v1201 = vadd.f32 0.0, %v1200
      %v1202 = vpop.f32.mrf.mxu0
      %1203 = vdwg.mxu0
      %v1204 = vmul.f32 %v784, %v979
      %v1205 = vmul.f32 %v789, %v984
      %v1206 = vmul.f32 %v794, %v989
      %v1207 = vmul.f32 %v799, %v994
      %v1208 = vmul.f32 %v804, %v999
      %v1209 = vmul.f32 %v809, %v1004
      %v1210 = vmul.f32 %v814, %v1009
      %v1211 = vmul.f32 %v819, %v1014
      %v1212 = vmul.f32 %v824, %v1019
      %v1213 = vmul.f32 %v829, %v1024
      %v1214 = vmul.f32 %v834, %v1029
      %v1215 = vmul.f32 %v839, %v1034
      %v1216 = vmul.f32 %v844, %v1039
      %v1217 = vmul.f32 %v849, %v1044
      %v1218 = vmul.f32 %v854, %v1049
      %v1219 = vmul.f32 %v859, %v1054
      %v1220 = vld [vmem:[%s6] sm:$0xff]
      %v1221 = vld [vmem:[%s6 + $0x8] sm:$0xff]
      %v1222 = vld [vmem:[%s6 + $0x10] sm:$0xff]
      %v1223 = vld [vmem:[%s6 + $0x18] sm:$0xff]
      %v1224 = vld [vmem:[%s6 + $0x20] sm:$0xff]
      %v1225 = vld [vmem:[%s6 + $0x28] sm:$0xff]
      %v1226 = vld [vmem:[%s6 + $0x30] sm:$0xff]
      %v1227 = vld [vmem:[%s6 + $0x38] sm:$0xff]
      %v1228 = vld [vmem:[%s6 + $0x40] sm:$0xff]
      %v1229 = vld [vmem:[%s6 + $0x48] sm:$0xff]
      %v1230 = vld [vmem:[%s6 + $0x50] sm:$0xff]
      %v1231 = vld [vmem:[%s6 + $0x58] sm:$0xff]
      %v1232 = vld [vmem:[%s6 + $0x60] sm:$0xff]
      %v1233 = vld [vmem:[%s6 + $0x68] sm:$0xff]
      %v1234 = vld [vmem:[%s6 + $0x70] sm:$0xff]
      %v1235 = vld [vmem:[%s6 + $0x78] sm:$0xff]
      %1236 = vmatprep.subr.mxu0 0.0
      %1237 = vmatpush1.msra.mxu0 %v1235
      %1238 = vmatprep.subr.mxu0 0.0
      %1239 = vmatpush1.msra.mxu0 %v1234
      %1240 = vmatprep.subr.mxu0 0.0
      %1241 = vmatpush1.msra.mxu0 %v1233
      %1242 = vmatprep.subr.mxu0 0.0
      %1243 = vmatpush1.msra.mxu0 %v1232
      %1244 = vmatprep.subr.mxu0 0.0
      %1245 = vmatpush1.msra.mxu0 %v1231
      %1246 = vmatprep.subr.mxu0 0.0
      %1247 = vmatpush1.msra.mxu0 %v1230
      %1248 = vmatprep.subr.mxu0 0.0
      %1249 = vmatpush1.msra.mxu0 %v1229
      %1250 = vmatprep.subr.mxu0 0.0
      %1251 = vmatpush1.msra.mxu0 %v1228
      %1252 = vmatprep.subr.mxu0 0.0
      %1253 = vmatpush1.msra.mxu0 %v1227
      %1254 = vmatprep.subr.mxu0 0.0
      %1255 = vmatpush1.msra.mxu0 %v1226
      %1256 = vmatprep.subr.mxu0 0.0
      %1257 = vmatpush1.msra.mxu0 %v1225
      %1258 = vmatprep.subr.mxu0 0.0
      %1259 = vmatpush1.msra.mxu0 %v1224
      %1260 = vmatprep.subr.mxu0 0.0
      %1261 = vmatpush1.msra.mxu0 %v1223
      %1262 = vmatprep.subr.mxu0 0.0
      %1263 = vmatpush1.msra.mxu0 %v1222
      %1264 = vmatprep.subr.mxu0 0.0
      %1265 = vmatpush1.msra.mxu0 %v1221
      %1266 = vmatprep.subr.mxu0 0.0
      %1267 = vmatpush1.msra.mxu0 %v1220
      %1268 = vmatprep.subr.mxu0 0.0
      %1269 = vmatpush2.msra.mxu0 0.0
      %1270 = vmatprep.subr.mxu0 0.0
      %1271 = vmatpush2.msra.mxu0 0.0
      %1272 = vmatprep.subr.mxu0 0.0
      %1273 = vmatpush2.msra.mxu0 0.0
      %1274 = vmatprep.subr.mxu0 0.0
      %1275 = vmatpush2.msra.mxu0 0.0
      %1276 = vmatprep.subr.mxu0 0.0
      %1277 = vmatpush2.msra.mxu0 0.0
      %1278 = vmatprep.subr.mxu0 0.0
      %1279 = vmatpush2.msra.mxu0 0.0
      %1280 = vmatprep.subr.mxu0 0.0
      %1281 = vmatpush2.msra.mxu0 0.0
      %1282 = vmatprep.subr.mxu0 0.0
      %1283 = vmatpush2.msra.mxu0 0.0
      %1284 = vmatprep.subr.mxu0 0.0
      %1285 = vmatpush2.msra.mxu0 0.0
      %1286 = vmatprep.subr.mxu0 0.0
      %1287 = vmatpush2.msra.mxu0 0.0
      %1288 = vmatprep.subr.mxu0 0.0
      %1289 = vmatpush2.msra.mxu0 0.0
      %1290 = vmatprep.subr.mxu0 0.0
      %1291 = vmatpush2.msra.mxu0 0.0
      %1292 = vmatprep.subr.mxu0 0.0
      %1293 = vmatpush2.msra.mxu0 0.0
      %1294 = vmatprep.subr.mxu0 0.0
      %1295 = vmatpush2.msra.mxu0 0.0
      %1296 = vmatprep.subr.mxu0 0.0
      %1297 = vmatpush2.msra.mxu0 0.0
      %1298 = vmatprep.subr.mxu0 0.0
      %1299 = vmatpush2.msra.mxu0 0.0
      %1300 = vmatprep.mubr.f32.mxu0 0.0
      %1301 = vmatmul.mubr.f32.gmra.mxu0 %v1204
      %v1302 = vpop.f32.mrf.mxu0
      %v1303 = vadd.f32 0.0, %v1302
      %v1304 = vpop.f32.mrf.mxu0
      %1305 = vmatprep.mubr.f32.mxu0 0.0
      %1306 = vmatmul.mubr.f32.gmra.mxu0 %v1205
      %v1307 = vpop.f32.mrf.mxu0
      %v1308 = vadd.f32 0.0, %v1307
      %v1309 = vpop.f32.mrf.mxu0
      %1310 = vmatprep.mubr.f32.mxu0 0.0
      %1311 = vmatmul.mubr.f32.gmra.mxu0 %v1206
      %v1312 = vpop.f32.mrf.mxu0
      %v1313 = vadd.f32 0.0, %v1312
      %v1314 = vpop.f32.mrf.mxu0
      %1315 = vmatprep.mubr.f32.mxu0 0.0
      %1316 = vmatmul.mubr.f32.gmra.mxu0 %v1207
      %v1317 = vpop.f32.mrf.mxu0
      %v1318 = vadd.f32 0.0, %v1317
      %v1319 = vpop.f32.mrf.mxu0
      %1320 = vmatprep.mubr.f32.mxu0 0.0
      %1321 = vmatmul.mubr.f32.gmra.mxu0 %v1208
      %v1322 = vpop.f32.mrf.mxu0
      %v1323 = vadd.f32 0.0, %v1322
      %v1324 = vpop.f32.mrf.mxu0
      %1325 = vmatprep.mubr.f32.mxu0 0.0
      %1326 = vmatmul.mubr.f32.gmra.mxu0 %v1209
      %v1327 = vpop.f32.mrf.mxu0
      %v1328 = vadd.f32 0.0, %v1327
      %v1329 = vpop.f32.mrf.mxu0
      %1330 = vmatprep.mubr.f32.mxu0 0.0
      %1331 = vmatmul.mubr.f32.gmra.mxu0 %v1210
      %v1332 = vpop.f32.mrf.mxu0
      %v1333 = vadd.f32 0.0, %v1332
      %v1334 = vpop.f32.mrf.mxu0
      %1335 = vmatprep.mubr.f32.mxu0 0.0
      %1336 = vmatmul.mubr.f32.gmra.mxu0 %v1211
      %v1337 = vpop.f32.mrf.mxu0
      %v1338 = vadd.f32 0.0, %v1337
      %v1339 = vpop.f32.mrf.mxu0
      %1340 = vmatprep.mubr.f32.mxu0 0.0
      %1341 = vmatmul.mubr.f32.gmra.mxu0 %v1212
      %v1342 = vpop.f32.mrf.mxu0
      %v1343 = vadd.f32 0.0, %v1342
      %v1344 = vpop.f32.mrf.mxu0
      %1345 = vmatprep.mubr.f32.mxu0 0.0
      %1346 = vmatmul.mubr.f32.gmra.mxu0 %v1213
      %v1347 = vpop.f32.mrf.mxu0
      %v1348 = vadd.f32 0.0, %v1347
      %v1349 = vpop.f32.mrf.mxu0
      %1350 = vmatprep.mubr.f32.mxu0 0.0
      %1351 = vmatmul.mubr.f32.gmra.mxu0 %v1214
      %v1352 = vpop.f32.mrf.mxu0
      %v1353 = vadd.f32 0.0, %v1352
      %v1354 = vpop.f32.mrf.mxu0
      %1355 = vmatprep.mubr.f32.mxu0 0.0
      %1356 = vmatmul.mubr.f32.gmra.mxu0 %v1215
      %v1357 = vpop.f32.mrf.mxu0
      %v1358 = vadd.f32 0.0, %v1357
      %v1359 = vpop.f32.mrf.mxu0
      %1360 = vmatprep.mubr.f32.mxu0 0.0
      %1361 = vmatmul.mubr.f32.gmra.mxu0 %v1216
      %v1362 = vpop.f32.mrf.mxu0
      %v1363 = vadd.f32 0.0, %v1362
      %v1364 = vpop.f32.mrf.mxu0
      %1365 = vmatprep.mubr.f32.mxu0 0.0
      %1366 = vmatmul.mubr.f32.gmra.mxu0 %v1217
      %v1367 = vpop.f32.mrf.mxu0
      %v1368 = vadd.f32 0.0, %v1367
      %v1369 = vpop.f32.mrf.mxu0
      %1370 = vmatprep.mubr.f32.mxu0 0.0
      %1371 = vmatmul.mubr.f32.gmra.mxu0 %v1218
      %v1372 = vpop.f32.mrf.mxu0
      %v1373 = vadd.f32 0.0, %v1372
      %v1374 = vpop.f32.mrf.mxu0
      %1375 = vmatprep.mubr.f32.mxu0 0.0
      %1376 = vmatmul.mubr.f32.gmra.mxu0 %v1219
      %v1377 = vpop.f32.mrf.mxu0
      %v1378 = vadd.f32 0.0, %v1377
      %v1379 = vpop.f32.mrf.mxu0
      %1380 = vdwg.mxu0
      %v1381 = vmax.f32 %v1303, -10.0
      %v1382 = vmax.f32 %v1308, -10.0
      %v1383 = vmax.f32 %v1313, -10.0
      %v1384 = vmax.f32 %v1318, -10.0
      %v1385 = vmax.f32 %v1323, -10.0
      %v1386 = vmax.f32 %v1328, -10.0
      %v1387 = vmax.f32 %v1333, -10.0
      %v1388 = vmax.f32 %v1338, -10.0
      %v1389 = vmax.f32 %v1343, -10.0
      %v1390 = vmax.f32 %v1348, -10.0
      %v1391 = vmax.f32 %v1353, -10.0
      %v1392 = vmax.f32 %v1358, -10.0
      %v1393 = vmax.f32 %v1363, -10.0
      %v1394 = vmax.f32 %v1368, -10.0
      %v1395 = vmax.f32 %v1373, -10.0
      %v1396 = vmax.f32 %v1378, -10.0
      %v1397 = vmin.f32 %v1381, 10.0
      %v1398 = vmin.f32 %v1382, 10.0
      %v1399 = vmin.f32 %v1383, 10.0
      %v1400 = vmin.f32 %v1384, 10.0
      %v1401 = vmin.f32 %v1385, 10.0
      %v1402 = vmin.f32 %v1386, 10.0
      %v1403 = vmin.f32 %v1387, 10.0
      %v1404 = vmin.f32 %v1388, 10.0
      %v1405 = vmin.f32 %v1389, 10.0
      %v1406 = vmin.f32 %v1390, 10.0
      %v1407 = vmin.f32 %v1391, 10.0
      %v1408 = vmin.f32 %v1392, 10.0
      %v1409 = vmin.f32 %v1393, 10.0
      %v1410 = vmin.f32 %v1394, 10.0
      %v1411 = vmin.f32 %v1395, 10.0
      %v1412 = vmin.f32 %v1396, 10.0
      %v1413 = vmul.f32 %v1397, 1.442695
      %v1414 = vpow.pop %v1413
      %v1415 = vmul.f32 %v1398, 1.442695
      %v1416 = vpow.pop %v1415
      %v1417 = vmul.f32 %v1399, 1.442695
      %v1418 = vpow.pop %v1417
      %v1419 = vmul.f32 %v1400, 1.442695
      %v1420 = vpow.pop %v1419
      %v1421 = vmul.f32 %v1401, 1.442695
      %v1422 = vpow.pop %v1421
      %v1423 = vmul.f32 %v1402, 1.442695
      %v1424 = vpow.pop %v1423
      %v1425 = vmul.f32 %v1403, 1.442695
      %v1426 = vpow.pop %v1425
      %v1427 = vmul.f32 %v1404, 1.442695
      %v1428 = vpow.pop %v1427
      %v1429 = vmul.f32 %v1405, 1.442695
      %v1430 = vpow.pop %v1429
      %v1431 = vmul.f32 %v1406, 1.442695
      %v1432 = vpow.pop %v1431
      %v1433 = vmul.f32 %v1407, 1.442695
      %v1434 = vpow.pop %v1433
      %v1435 = vmul.f32 %v1408, 1.442695
      %v1436 = vpow.pop %v1435
      %v1437 = vmul.f32 %v1409, 1.442695
      %v1438 = vpow.pop %v1437
      %v1439 = vmul.f32 %v1410, 1.442695
      %v1440 = vpow.pop %v1439
      %v1441 = vmul.f32 %v1411, 1.442695
      %v1442 = vpow.pop %v1441
      %v1443 = vmul.f32 %v1412, 1.442695
      %v1444 = vpow.pop %v1443
      %v1445 = vld [vmem:[%s7] sm:$0xf]
      %vm1446 = vcmask 31744
      %v1448 = vsel %vm1446, %v1414, 0
      %v1451 = vsel %vm1446, %v1416, 0
      %v1454 = vsel %vm1446, %v1418, 0
      %v1457 = vsel %vm1446, %v1420, 0
      %v1460 = vsel %vm1446, %v1422, 0
      %v1463 = vsel %vm1446, %v1424, 0
      %v1466 = vsel %vm1446, %v1426, 0
      %v1469 = vsel %vm1446, %v1428, 0
      %v1472 = vsel %vm1446, %v1430, 0
      %v1475 = vsel %vm1446, %v1432, 0
      %v1478 = vsel %vm1446, %v1434, 0
      %v1481 = vsel %vm1446, %v1436, 0
      %v1484 = vsel %vm1446, %v1438, 0
      %v1487 = vsel %vm1446, %v1440, 0
      %v1490 = vsel %vm1446, %v1442, 0
      %v1493 = vsel %vm1446, %v1444, 0
      %vm1495 = vcmask 1043456
      %v1497 = vsel %vm1495, %v1445, 0
      %1499 = vmatprep.subr.mxu0 0.0
      %1500 = vmatpush1.msra.mxu0 0.0
      %1501 = vmatprep.subr.mxu0 0.0
      %1502 = vmatpush1.msra.mxu0 0.0
      %1503 = vmatprep.subr.mxu0 0.0
      %1504 = vmatpush1.msra.mxu0 0.0
      %1505 = vmatprep.subr.mxu0 0.0
      %1506 = vmatpush1.msra.mxu0 0.0
      %1507 = vmatprep.subr.mxu0 0.0
      %1508 = vmatpush1.msra.mxu0 0.0
      %1509 = vmatprep.subr.mxu0 0.0
      %1510 = vmatpush1.msra.mxu0 0.0
      %1511 = vmatprep.subr.mxu0 0.0
      %1512 = vmatpush1.msra.mxu0 0.0
      %1513 = vmatprep.subr.mxu0 0.0
      %1514 = vmatpush1.msra.mxu0 0.0
      %1515 = vmatprep.subr.mxu0 0.0
      %1516 = vmatpush1.msra.mxu0 0.0
      %1517 = vmatprep.subr.mxu0 0.0
      %1518 = vmatpush1.msra.mxu0 0.0
      %1519 = vmatprep.subr.mxu0 0.0
      %1520 = vmatpush1.msra.mxu0 0.0
      %1521 = vmatprep.subr.mxu0 0.0
      %1522 = vmatpush1.msra.mxu0 0.0
      %1523 = vmatprep.subr.mxu0 0.0
      %1524 = vmatpush1.msra.mxu0 0.0
      %1525 = vmatprep.subr.mxu0 0.0
      %1526 = vmatpush1.msra.mxu0 0.0
      %1527 = vmatprep.subr.mxu0 0.0
      %1528 = vmatpush1.msra.mxu0 0.0
      %1529 = vmatprep.subr.mxu0 0.0
      %1530 = vmatpush1.msra.mxu0 %v1497
      %1531 = vmatprep.subr.mxu0 0.0
      %1532 = vmatpush2.msra.mxu0 0.0
      %1533 = vmatprep.subr.mxu0 0.0
      %1534 = vmatpush2.msra.mxu0 0.0
      %1535 = vmatprep.subr.mxu0 0.0
      %1536 = vmatpush2.msra.mxu0 0.0
      %1537 = vmatprep.subr.mxu0 0.0
      %1538 = vmatpush2.msra.mxu0 0.0
      %1539 = vmatprep.subr.mxu0 0.0
      %1540 = vmatpush2.msra.mxu0 0.0
      %1541 = vmatprep.subr.mxu0 0.0
      %1542 = vmatpush2.msra.mxu0 0.0
      %1543 = vmatprep.subr.mxu0 0.0
      %1544 = vmatpush2.msra.mxu0 0.0
      %1545 = vmatprep.subr.mxu0 0.0
      %1546 = vmatpush2.msra.mxu0 0.0
      %1547 = vmatprep.subr.mxu0 0.0
      %1548 = vmatpush2.msra.mxu0 0.0
      %1549 = vmatprep.subr.mxu0 0.0
      %1550 = vmatpush2.msra.mxu0 0.0
      %1551 = vmatprep.subr.mxu0 0.0
      %1552 = vmatpush2.msra.mxu0 0.0
      %1553 = vmatprep.subr.mxu0 0.0
      %1554 = vmatpush2.msra.mxu0 0.0
      %1555 = vmatprep.subr.mxu0 0.0
      %1556 = vmatpush2.msra.mxu0 0.0
      %1557 = vmatprep.subr.mxu0 0.0
      %1558 = vmatpush2.msra.mxu0 0.0
      %1559 = vmatprep.subr.mxu0 0.0
      %1560 = vmatpush2.msra.mxu0 0.0
      %1561 = vmatprep.subr.mxu0 0.0
      %1562 = vmatpush2.msra.mxu0 0.0
      %1563 = vmatprep.mubr.f32.mxu0 0.0
      %1564 = vmatmul.mubr.f32.gmra.mxu0 %v1448
      %v1565 = vpop.f32.mrf.mxu0
      %v1566 = vadd.f32 0.0, %v1565
      %v1567 = vpop.f32.mrf.mxu0
      %1568 = vmatprep.mubr.f32.mxu0 0.0
      %1569 = vmatmul.mubr.f32.gmra.mxu0 %v1451
      %v1570 = vpop.f32.mrf.mxu0
      %v1571 = vadd.f32 0.0, %v1570
      %v1572 = vpop.f32.mrf.mxu0
      %1573 = vmatprep.mubr.f32.mxu0 0.0
      %1574 = vmatmul.mubr.f32.gmra.mxu0 %v1454
      %v1575 = vpop.f32.mrf.mxu0
      %v1576 = vadd.f32 0.0, %v1575
      %v1577 = vpop.f32.mrf.mxu0
      %1578 = vmatprep.mubr.f32.mxu0 0.0
      %1579 = vmatmul.mubr.f32.gmra.mxu0 %v1457
      %v1580 = vpop.f32.mrf.mxu0
      %v1581 = vadd.f32 0.0, %v1580
      %v1582 = vpop.f32.mrf.mxu0
      %1583 = vmatprep.mubr.f32.mxu0 0.0
      %1584 = vmatmul.mubr.f32.gmra.mxu0 %v1460
      %v1585 = vpop.f32.mrf.mxu0
      %v1586 = vadd.f32 0.0, %v1585
      %v1587 = vpop.f32.mrf.mxu0
      %1588 = vmatprep.mubr.f32.mxu0 0.0
      %1589 = vmatmul.mubr.f32.gmra.mxu0 %v1463
      %v1590 = vpop.f32.mrf.mxu0
      %v1591 = vadd.f32 0.0, %v1590
      %v1592 = vpop.f32.mrf.mxu0
      %1593 = vmatprep.mubr.f32.mxu0 0.0
      %1594 = vmatmul.mubr.f32.gmra.mxu0 %v1466
      %v1595 = vpop.f32.mrf.mxu0
      %v1596 = vadd.f32 0.0, %v1595
      %v1597 = vpop.f32.mrf.mxu0
      %1598 = vmatprep.mubr.f32.mxu0 0.0
      %1599 = vmatmul.mubr.f32.gmra.mxu0 %v1469
      %v1600 = vpop.f32.mrf.mxu0
      %v1601 = vadd.f32 0.0, %v1600
      %v1602 = vpop.f32.mrf.mxu0
      %1603 = vmatprep.mubr.f32.mxu0 0.0
      %1604 = vmatmul.mubr.f32.gmra.mxu0 %v1472
      %v1605 = vpop.f32.mrf.mxu0
      %v1606 = vadd.f32 0.0, %v1605
      %v1607 = vpop.f32.mrf.mxu0
      %1608 = vmatprep.mubr.f32.mxu0 0.0
      %1609 = vmatmul.mubr.f32.gmra.mxu0 %v1475
      %v1610 = vpop.f32.mrf.mxu0
      %v1611 = vadd.f32 0.0, %v1610
      %v1612 = vpop.f32.mrf.mxu0
      %1613 = vmatprep.mubr.f32.mxu0 0.0
      %1614 = vmatmul.mubr.f32.gmra.mxu0 %v1478
      %v1615 = vpop.f32.mrf.mxu0
      %v1616 = vadd.f32 0.0, %v1615
      %v1617 = vpop.f32.mrf.mxu0
      %1618 = vmatprep.mubr.f32.mxu0 0.0
      %1619 = vmatmul.mubr.f32.gmra.mxu0 %v1481
      %v1620 = vpop.f32.mrf.mxu0
      %v1621 = vadd.f32 0.0, %v1620
      %v1622 = vpop.f32.mrf.mxu0
      %1623 = vmatprep.mubr.f32.mxu0 0.0
      %1624 = vmatmul.mubr.f32.gmra.mxu0 %v1484
      %v1625 = vpop.f32.mrf.mxu0
      %v1626 = vadd.f32 0.0, %v1625
      %v1627 = vpop.f32.mrf.mxu0
      %1628 = vmatprep.mubr.f32.mxu0 0.0
      %1629 = vmatmul.mubr.f32.gmra.mxu0 %v1487
      %v1630 = vpop.f32.mrf.mxu0
      %v1631 = vadd.f32 0.0, %v1630
      %v1632 = vpop.f32.mrf.mxu0
      %1633 = vmatprep.mubr.f32.mxu0 0.0
      %1634 = vmatmul.mubr.f32.gmra.mxu0 %v1490
      %v1635 = vpop.f32.mrf.mxu0
      %v1636 = vadd.f32 0.0, %v1635
      %v1637 = vpop.f32.mrf.mxu0
      %1638 = vmatprep.mubr.f32.mxu0 0.0
      %1639 = vmatmul.mubr.f32.gmra.mxu0 %v1493
      %v1640 = vpop.f32.mrf.mxu0
      %v1641 = vadd.f32 0.0, %v1640
      %v1642 = vpop.f32.mrf.mxu0
      %1643 = vdwg.mxu0
      %v1644 = vmul.f32 %v1566, %v1126
      %v1645 = vmul.f32 %v1571, %v1131
      %v1646 = vmul.f32 %v1576, %v1136
      %v1647 = vmul.f32 %v1581, %v1141
      %v1648 = vmul.f32 %v1586, %v1146
      %v1649 = vmul.f32 %v1591, %v1151
      %v1650 = vmul.f32 %v1596, %v1156
      %v1651 = vmul.f32 %v1601, %v1161
      %v1652 = vmul.f32 %v1606, %v1166
      %v1653 = vmul.f32 %v1611, %v1171
      %v1654 = vmul.f32 %v1616, %v1176
      %v1655 = vmul.f32 %v1621, %v1181
      %v1656 = vmul.f32 %v1626, %v1186
      %v1657 = vmul.f32 %v1631, %v1191
      %v1658 = vmul.f32 %v1636, %v1196
      %v1659 = vmul.f32 %v1641, %v1201
      %v1660 = vld [vmem:[%s411] sm:$0xff]
      %v1661 = vld [vmem:[%s411 + $0x8] sm:$0xff]
      %1662 = vmatprep.subr.mxu0 0.0
      %1663 = vmatpush1.msra.mxu0 %v1444
      %1664 = vmatprep.subr.mxu0 0.0
      %1665 = vmatpush1.msra.mxu0 %v1442
      %1666 = vmatprep.subr.mxu0 0.0
      %1667 = vmatpush1.msra.mxu0 %v1440
      %1668 = vmatprep.subr.mxu0 0.0
      %1669 = vmatpush1.msra.mxu0 %v1438
      %1670 = vmatprep.subr.mxu0 0.0
      %1671 = vmatpush1.msra.mxu0 %v1436
      %1672 = vmatprep.subr.mxu0 0.0
      %1673 = vmatpush1.msra.mxu0 %v1434
      %1674 = vmatprep.subr.mxu0 0.0
      %1675 = vmatpush1.msra.mxu0 %v1432
      %1676 = vmatprep.subr.mxu0 0.0
      %1677 = vmatpush1.msra.mxu0 %v1430
      %1678 = vmatprep.subr.mxu0 0.0
      %1679 = vmatpush1.msra.mxu0 %v1428
      %1680 = vmatprep.subr.mxu0 0.0
      %1681 = vmatpush1.msra.mxu0 %v1426
      %1682 = vmatprep.subr.mxu0 0.0
      %1683 = vmatpush1.msra.mxu0 %v1424
      %1684 = vmatprep.subr.mxu0 0.0
      %1685 = vmatpush1.msra.mxu0 %v1422
      %1686 = vmatprep.subr.mxu0 0.0
      %1687 = vmatpush1.msra.mxu0 %v1420
      %1688 = vmatprep.subr.mxu0 0.0
      %1689 = vmatpush1.msra.mxu0 %v1418
      %1690 = vmatprep.subr.mxu0 0.0
      %1691 = vmatpush1.msra.mxu0 %v1416
      %1692 = vmatprep.subr.mxu0 0.0
      %1693 = vmatpush1.msra.mxu0 %v1414
      %1694 = vmatprep.subr.mxu0 0.0
      %1695 = vmatpush2.msra.mxu0 0.0
      %1696 = vmatprep.subr.mxu0 0.0
      %1697 = vmatpush2.msra.mxu0 0.0
      %1698 = vmatprep.subr.mxu0 0.0
      %1699 = vmatpush2.msra.mxu0 0.0
      %1700 = vmatprep.subr.mxu0 0.0
      %1701 = vmatpush2.msra.mxu0 0.0
      %1702 = vmatprep.subr.mxu0 0.0
      %1703 = vmatpush2.msra.mxu0 0.0
      %1704 = vmatprep.subr.mxu0 0.0
      %1705 = vmatpush2.msra.mxu0 0.0
      %1706 = vmatprep.subr.mxu0 0.0
      %1707 = vmatpush2.msra.mxu0 0.0
      %1708 = vmatprep.subr.mxu0 0.0
      %1709 = vmatpush2.msra.mxu0 0.0
      %1710 = vmatprep.subr.mxu0 0.0
      %1711 = vmatpush2.msra.mxu0 0.0
      %1712 = vmatprep.subr.mxu0 0.0
      %1713 = vmatpush2.msra.mxu0 0.0
      %1714 = vmatprep.subr.mxu0 0.0
      %1715 = vmatpush2.msra.mxu0 0.0
      %1716 = vmatprep.subr.mxu0 0.0
      %1717 = vmatpush2.msra.mxu0 0.0
      %1718 = vmatprep.subr.mxu0 0.0
      %1719 = vmatpush2.msra.mxu0 0.0
      %1720 = vmatprep.subr.mxu0 0.0
      %1721 = vmatpush2.msra.mxu0 0.0
      %1722 = vmatprep.subr.mxu0 0.0
      %1723 = vmatpush2.msra.mxu0 0.0
      %1724 = vmatprep.subr.mxu0 0.0
      %1725 = vmatpush2.msra.mxu0 0.0
      %1726 = vmatprep.mubr.f32.mxu0 0.0
      %1727 = vmatmul.mubr.f32.gmra.mxu0 %v664
      %v1728 = vpop.f32.mrf.mxu0
      %v1729 = vadd.f32 0.0, %v1728
      %v1730 = vpop.f32.mrf.mxu0
      %1731 = vmatprep.mubr.f32.mxu0 0.0
      %1732 = vmatmul.mubr.f32.gmra.mxu0 %v665
      %v1733 = vpop.f32.mrf.mxu0
      %v1734 = vadd.f32 0.0, %v1733
      %v1735 = vpop.f32.mrf.mxu0
      %1736 = vdwg.mxu0
      %v1737 = vadd.f32 %v1660, %v1729
      %v1738 = vadd.f32 %v1661, %v1734
      %1739 = vst.msk [vmem:[%s411] sm:$0xff] %vm1446, %v1737
      %1740 = vst.msk [vmem:[%s411 + $0x8] sm:$0xff] %vm1446, %v1738
      %v1741 = vld [vmem:[%s416] sm:$0xff]
      %v1742 = vld [vmem:[%s416 + $0x8] sm:$0xff]
      %1743 = vmatprep.subr.mxu0 0.0
      %1744 = vmatpush1.msra.mxu0 %v1659
      %1745 = vmatprep.subr.mxu0 0.0
      %1746 = vmatpush1.msra.mxu0 %v1658
      %1747 = vmatprep.subr.mxu0 0.0
      %1748 = vmatpush1.msra.mxu0 %v1657
      %1749 = vmatprep.subr.mxu0 0.0
      %1750 = vmatpush1.msra.mxu0 %v1656
      %1751 = vmatprep.subr.mxu0 0.0
      %1752 = vmatpush1.msra.mxu0 %v1655
      %1753 = vmatprep.subr.mxu0 0.0
      %1754 = vmatpush1.msra.mxu0 %v1654
      %1755 = vmatprep.subr.mxu0 0.0
      %1756 = vmatpush1.msra.mxu0 %v1653
      %1757 = vmatprep.subr.mxu0 0.0
      %1758 = vmatpush1.msra.mxu0 %v1652
      %1759 = vmatprep.subr.mxu0 0.0
      %1760 = vmatpush1.msra.mxu0 %v1651
      %1761 = vmatprep.subr.mxu0 0.0
      %1762 = vmatpush1.msra.mxu0 %v1650
      %1763 = vmatprep.subr.mxu0 0.0
      %1764 = vmatpush1.msra.mxu0 %v1649
      %1765 = vmatprep.subr.mxu0 0.0
      %1766 = vmatpush1.msra.mxu0 %v1648
      %1767 = vmatprep.subr.mxu0 0.0
      %1768 = vmatpush1.msra.mxu0 %v1647
      %1769 = vmatprep.subr.mxu0 0.0
      %1770 = vmatpush1.msra.mxu0 %v1646
      %1771 = vmatprep.subr.mxu0 0.0
      %1772 = vmatpush1.msra.mxu0 %v1645
      %1773 = vmatprep.subr.mxu0 0.0
      %1774 = vmatpush1.msra.mxu0 %v1644
      %1775 = vmatprep.subr.mxu0 0.0
      %1776 = vmatpush2.msra.mxu0 0.0
      %1777 = vmatprep.subr.mxu0 0.0
      %1778 = vmatpush2.msra.mxu0 0.0
      %1779 = vmatprep.subr.mxu0 0.0
      %1780 = vmatpush2.msra.mxu0 0.0
      %1781 = vmatprep.subr.mxu0 0.0
      %1782 = vmatpush2.msra.mxu0 0.0
      %1783 = vmatprep.subr.mxu0 0.0
      %1784 = vmatpush2.msra.mxu0 0.0
      %1785 = vmatprep.subr.mxu0 0.0
      %1786 = vmatpush2.msra.mxu0 0.0
      %1787 = vmatprep.subr.mxu0 0.0
      %1788 = vmatpush2.msra.mxu0 0.0
      %1789 = vmatprep.subr.mxu0 0.0
      %1790 = vmatpush2.msra.mxu0 0.0
      %1791 = vmatprep.subr.mxu0 0.0
      %1792 = vmatpush2.msra.mxu0 0.0
      %1793 = vmatprep.subr.mxu0 0.0
      %1794 = vmatpush2.msra.mxu0 0.0
      %1795 = vmatprep.subr.mxu0 0.0
      %1796 = vmatpush2.msra.mxu0 0.0
      %1797 = vmatprep.subr.mxu0 0.0
      %1798 = vmatpush2.msra.mxu0 0.0
      %1799 = vmatprep.subr.mxu0 0.0
      %1800 = vmatpush2.msra.mxu0 0.0
      %1801 = vmatprep.subr.mxu0 0.0
      %1802 = vmatpush2.msra.mxu0 0.0
      %1803 = vmatprep.subr.mxu0 0.0
      %1804 = vmatpush2.msra.mxu0 0.0
      %1805 = vmatprep.subr.mxu0 0.0
      %1806 = vmatpush2.msra.mxu0 0.0
      %1807 = vmatprep.mubr.f32.mxu0 0.0
      %1808 = vmatmul.mubr.f32.gmra.mxu0 %v664
      %v1809 = vpop.f32.mrf.mxu0
      %v1810 = vadd.f32 0.0, %v1809
      %v1811 = vpop.f32.mrf.mxu0
      %1812 = vmatprep.mubr.f32.mxu0 0.0
      %1813 = vmatmul.mubr.f32.gmra.mxu0 %v665
      %v1814 = vpop.f32.mrf.mxu0
      %v1815 = vadd.f32 0.0, %v1814
      %v1816 = vpop.f32.mrf.mxu0
      %1817 = vdwg.mxu0
      %v1818 = vadd.f32 %v1741, %v1810
      %v1819 = vadd.f32 %v1742, %v1815
      %1820 = vst [vmem:[%s416] sm:$0xff] %v1818
      %1821 = vst [vmem:[%s416 + $0x8] sm:$0xff] %v1819
      %p1822 = scmp.lt.s32.totalorder %s25, 1
      %s1823 = scalar_select %p1822, %s25, 1
      %s1824 = smul.addr %s1823, 2
      %s1825 = smul.addr %s1824, 8
      %s1826 = scalar_lea.vmem %s8, %s1825
      %p1827 = scmp.lt.s32.totalorder %s25, 1
      %s1828 = scalar_select %p1827, %s25, 1
      %s1829 = smul.addr %s1828, 2
      %s1830 = smul.addr %s1829, 8
      %s1831 = scalar_lea.vmem %s9, %s1830
      // Predicated region
      $region57: #{gt_layer_forward.2} parent=51 // pred_check
        %p1832 = pneg %p240
      $region58: #{gt_layer_forward.2} parent=51 // pred_check_branch
        %1834 = sbr.rel (%p1832) target = $region60
      $region59: #{gt_layer_forward.2} parent=51 // pred_region
        _
      $region60: #{gt_layer_forward.2} parent=51 // pred_fallthru
        _
      // Predicated region
      $region61: #{gt_layer_forward.2} parent=51 // pred_check
        %p1835 = pneg %p266
      $region62: #{gt_layer_forward.2} parent=51 // pred_check_branch
        %1837 = sbr.rel (%p1835) target = $region64
      $region63: #{gt_layer_forward.2} parent=51 // pred_region
        _
      $region64: #{gt_layer_forward.2} parent=51 // pred_fallthru
        _
    $region52: #{gt_layer_forward.2} parent=5 // pred_fallthru
      _
    %p1838 = scmp.le.s32.totalorder 2, %s16
    // Predicated region
    $region65: #{gt_layer_forward.2} parent=5 // pred_check
      %p1839 = pneg %p1838
    $region66: #{gt_layer_forward.2} parent=5 // pred_check_branch
      %1841 = sbr.rel (%p1839) target = $region68
    $region67: #{gt_layer_forward.2} parent=5 // pred_region
      %s1842 = ssub.s32 %s16, 2
      // Predicated region
      $region69: #{gt_layer_forward.2} parent=67 // pred_check
        %p1843 = pneg %p246
      $region70: #{gt_layer_forward.2} parent=67 // pred_check_branch
        %1845 = sbr.rel (%p1843) target = $region72
      $region71: #{gt_layer_forward.2} parent=67 // pred_region
        %p1846 = scmp.lt.s32.totalorder %s27, 1
        %s1847 = scalar_select %p1846, %s27, 1
        %s1848 = smul.addr %s1847, 2
        %s1849 = smul.addr %s1848, 8
        %s1850 = scalar_lea.vmem %s8, %s1849
      $region72: #{gt_layer_forward.2} parent=67 // pred_fallthru
        _
      // Predicated region
      $region73: #{gt_layer_forward.2} parent=67 // pred_check
        %p1851 = pneg %p272
      $region74: #{gt_layer_forward.2} parent=67 // pred_check_branch
        %1853 = sbr.rel (%p1851) target = $region76
      $region75: #{gt_layer_forward.2} parent=67 // pred_region
        %p1854 = scmp.lt.s32.totalorder %s27, 1
        %s1855 = scalar_select %p1854, %s27, 1
        %s1856 = smul.addr %s1855, 2
        %s1857 = smul.addr %s1856, 8
        %s1858 = scalar_lea.vmem %s9, %s1857
      $region76: #{gt_layer_forward.2} parent=67 // pred_fallthru
        _
    $region68: #{gt_layer_forward.2} parent=5 // pred_fallthru
      _
  $region6: #{gt_layer_forward.2} parent=0 // loop_footer
    %s20 = sadd.s32 1, %s16
  $region7: #{gt_layer_forward.2} parent=0 // loop_footer_branch
    %15 = sbr.rel target = $region3
  $region8: #{gt_layer_forward.2} parent=0 // loop_exit
    _

</llo_original>
